<compile_context>
chip_gen: v7x
topology: tpu7x:2x2x1
jax: 0.10.0
libtpu: 0.0.40
codegen_flags: <defaults>
</compile_context>

<pallas_src>
import math
import numpy as np
import jax
import jax.numpy as jnp
from jax.experimental import pallas as pl
from jax.experimental.pallas import tpu as pltpu

# Small, structure-preserving shapes (original: in_channel=300, gc1->1024,
# gc2->2048 == ResNet feature dim, 14x14 spatial before MaxPool2d(14,14)).
B = 2             # batch
H = W = 14        # spatial size of backbone output (MaxPool2d(14,14) -> 1x1)
C_IMG = 4         # stand-in backbone input channels
NUM_CLASSES = 8   # num_classes
NUM_PAD = 128     # class axis padded to one full 128-lane register
IN_CHANNEL = 32   # word-embedding dim (original 300)
HID = 64          # gc1 out_features (original 1024)
FEAT = 128        # gc2 out_features == backbone feature dim (original 2048)
N_ADJ = 3         # adjacency channels: identity + 2 synthetic "adj_files"


def gcn_resnet_kernel(inp_ref, A_ref, gtw_ref, w1_ref, w2_ref,
                      img_ref, wc_ref, bc_ref, out_ref, feat_sc):
    """Fused forward: GT head + backbone stand-in + max-pool + classifier.

    Per grid step: the (batch-invariant) head is recomputed (cheap, keeps the
    kernel megacore-safe under "parallel"), TB batch elements are processed,
    and one MXU dot produces a lane-dense (TB, NUM_PAD) output block.
    """
    f32 = jnp.float32
    C, K, _ = A_ref.shape                                       # (N_ADJ, K, K)

    # ---- GTLayer (first=True): two softmax 1x1 channel mixes + matmul ------
    def channel_mix(w):                                         # w: (1, C)
        w = w - jnp.max(w, axis=-1, keepdims=True)
        e = jnp.exp(w)
        sw = e / jnp.sum(e, axis=-1, keepdims=True)             # softmax
        acc = A_ref[0] * sw[:, 0:1]
        for c in range(1, C):                                   # static, C=3
            acc = acc + A_ref[c] * sw[:, c:c + 1]
        return acc                                              # (K, K)

    a1 = channel_mix(gtw_ref[0:1, :])
    a2 = channel_mix(gtw_ref[1:2, :])
    Hm = jnp.dot(a1, a2, preferred_element_type=f32)            # (K, K)

    # adj = squeeze(H, 0) + eye(num_classes)
    rows = jax.lax.broadcasted_iota(jnp.int32, (K, K), 0)
    cols = jax.lax.broadcasted_iota(jnp.int32, (K, K), 1)
    eye = jnp.where(rows == cols, 1.0, 0.0).astype(f32)
    adj0 = Hm + eye

    # gen_adj: D = diag(rowsum^-0.5); adj = (A @ D).T @ D -> d_i * A[j,i] * d_j
    d = jax.lax.rsqrt(jnp.sum(adj0, axis=1, keepdims=True))     # (K, 1)
    adj = d * adj0.T * d.T                                      # (K, K)

    # ---- GCN head: gc1 -> LeakyReLU(0.2) -> gc2 -----------------------------
    inp = inp_ref[...]                                          # (K, IN_CHANNEL)
    sup1 = jnp.dot(inp, w1_ref[...], preferred_element_type=f32)
    xh = jnp.dot(adj, sup1, preferred_element_type=f32)         # (K, HID)
    xh = jnp.where(xh > 0, xh, 0.2 * xh)                        # LeakyReLU(0.2)
    sup2 = jnp.dot(xh, w2_ref[...], preferred_element_type=f32)
    x = jnp.dot(adj, sup2, preferred_element_type=f32)          # (K, FEAT)

    # Pre-transposed, class-padded classifier built in registers (single-shot,
    # no zero-init-then-overwrite store).  Padded columns are exactly zero.
    x_pad = jnp.concatenate(
        [x, jnp.zeros((NUM_PAD - K, FEAT), f32)], axis=0)       # (NUM_PAD, FEAT)
    xT = x_pad.T                                                # (FEAT, NUM_PAD)

    # ---- backbone stand-in + ReLU + global max pool, TB elements ------------
    wc = wc_ref[...]                                            # (C_IMG, FEAT)
    bc = bc_ref[...]                                            # (1, FEAT)
    TB = img_ref.shape[0]
    for t in range(TB):                                         # static, small TB
        im = img_ref[t]                                         # (H*W, C_IMG)
        # Pointwise conv: contraction dim C_IMG=4 -> 4 VPU broadcast MACs
        # (an MXU matmul would be ~3% occupied along K at this size).
        fm = im[:, 0:1] * wc[0:1, :]                            # (H*W, FEAT)
        for c in range(1, wc.shape[0]):                         # static, C_IMG=4
            fm = fm + im[:, c:c + 1] * wc[c:c + 1, :]
        fm = jnp.maximum(fm + bc, 0.0)                          # bias + ReLU
        feat_sc[t:t + 1, :] = jnp.max(fm, axis=0, keepdims=True)  # (1, FEAT)

    # ---- classifier: one MXU dot for the whole batch tile --------------------
    feat = feat_sc[...]                                         # (TB, FEAT)
    out = jnp.dot(feat, xT, preferred_element_type=f32)         # (TB, NUM_PAD)
    out_ref[...] = out.astype(out_ref.dtype)                    # lane-dense store


def _padded_tile_bytes(shape, itemsize=4):
    """Bytes of a VMEM tile after (8, 128) layout padding of the minor dims."""
    s = list(shape)
    s[-1] = -(-s[-1] // 128) * 128
    if len(s) >= 2:
        s[-2] = -(-s[-2] // 8) * 8
    n = 1
    for dim in s:
        n *= dim
    return itemsize * n


def _vmem_limit_bytes(tb, hw, c_img, k, in_ch):
    """Footprint-derived VMEM limit (double-buffered tiles + live temps)."""
    tiles = (_padded_tile_bytes((k, in_ch)) +
             _padded_tile_bytes((N_ADJ, k, k)) +
             _padded_tile_bytes((2, N_ADJ)) +
             _padded_tile_bytes((in_ch, HID)) +
             _padded_tile_bytes((HID, FEAT)) +
             _padded_tile_bytes((tb, hw, c_img)) +
             _padded_tile_bytes((c_img, FEAT)) +
             _padded_tile_bytes((1, FEAT)) +
             _padded_tile_bytes((tb, NUM_PAD)))
    temps = (_padded_tile_bytes((hw, FEAT)) +                 # per-element fmap
             3 * _padded_tile_bytes((NUM_PAD, FEAT)) +        # x_pad / xT / dot
             _padded_tile_bytes((tb, FEAT)))                  # feat scratch
    est = 2 * tiles + temps
    # generous headroom + 8 MiB floor (covers compiler internal scratch).
    return max(8 * 1024 * 1024, 4 * est)


def gcn_resnet_forward(feature_nchw, inp, params, *, tb=None):
    """feature_nchw: (B, C_IMG, H, W) (PyTorch NCHW); inp: (B, K, IN_CHANNEL)."""
    Bn, C_img, Hh, Ww = feature_nchw.shape
    HWp = Hh * Ww
    img = jnp.transpose(feature_nchw, (0, 2, 3, 1)).reshape(Bn, HWp, C_img)
    inp0 = inp[0]                                               # inp = inp[0]
    K = inp0.shape[0]
    gtw = jnp.concatenate([params["gtw1"], params["gtw2"]], axis=0)  # (2, N_ADJ)

    # Batch tile: at toy scale process the whole batch in one grid step.
    # TODO(synk): at real batch pick tb=8..128 (v5e) / up to 256 (v6e, v7x),
    #             sized against 64 MiB VMEM on v7x.
    if tb is None:
        tb = Bn
    assert Bn % tb == 0
    grid = (Bn // tb,)

    out_pad = pl.pallas_call(
        gcn_resnet_kernel,
        out_shape=jax.ShapeDtypeStruct((Bn, NUM_PAD), jnp.float32),
        grid=grid,
        in_specs=[
            pl.BlockSpec((K, IN_CHANNEL), lambda b: (0, 0)),        # inp0
            pl.BlockSpec((N_ADJ, K, K), lambda b: (0, 0, 0)),       # A
            pl.BlockSpec((2, N_ADJ), lambda b: (0, 0)),             # gtw1|gtw2
            pl.BlockSpec((IN_CHANNEL, HID), lambda b: (0, 0)),      # w1
            pl.BlockSpec((HID, FEAT), lambda b: (0, 0)),            # w2
            pl.BlockSpec((tb, HWp, C_img), lambda b: (b, 0, 0)),    # img tile
            pl.BlockSpec((C_img, FEAT), lambda b: (0, 0)),          # wc
            pl.BlockSpec((1, FEAT), lambda b: (0, 0)),              # bc
        ],
        out_specs=pl.BlockSpec((tb, NUM_PAD), lambda b: (b, 0)),
        scratch_shapes=[pltpu.VMEM((tb, FEAT), jnp.float32)],       # pooled rows
        compiler_params=pltpu.CompilerParams(
            # Head is recomputed per step (no cross-step state), so megacore
            # parallel sharding on v7x is safe.
            dimension_semantics=("parallel",),
            vmem_limit_bytes=_vmem_limit_bytes(tb, HWp, C_img, K, IN_CHANNEL)),
    )(inp0, params["A"], gtw, params["w1"], params["w2"],
      img, params["wc"], params["bc"])

    # Drop the padded class columns outside the kernel.
    return out_pad[:, :NUM_CLASSES]


def gcn_resnet_reference(feature_nchw, inp, params):
    """Pure-JAX mirror of the forward pass for correctness checking."""
    Bn, C_img, Hh, Ww = feature_nchw.shape
    img = jnp.transpose(feature_nchw, (0, 2, 3, 1)).reshape(Bn, Hh * Ww, C_img)
    inp0 = inp[0]
    A = params["A"]

    def mix(w):
        sw = jax.nn.softmax(w, axis=-1)                         # (1, C)
        return jnp.einsum("c,ckl->kl", sw[0], A)

    Hm = mix(params["gtw1"]) @ mix(params["gtw2"])
    adj0 = Hm + jnp.eye(NUM_CLASSES, dtype=jnp.float32)
    dvec = adj0.sum(1) ** -0.5
    adj = dvec[:, None] * adj0.T * dvec[None, :]

    x = adj @ (inp0 @ params["w1"])
    x = jnp.where(x > 0, x, 0.2 * x)
    x = adj @ (x @ params["w2"])                                # (K, FEAT)

    fmap = jnp.maximum(jnp.einsum("bpc,cf->bpf", img, params["wc"])
                       + params["bc"][None], 0.0)
    feat = fmap.max(axis=1)                                     # (B, FEAT)
    return feat @ x.T                                           # (B, K)


def make_params(key):
    ks = jax.random.split(key, 10)
    stdv1 = 1.0 / math.sqrt(HID)
    stdv2 = 1.0 / math.sqrt(FEAT)
    params = {
        # GraphConvolution weights (uniform(-1/sqrt(out), 1/sqrt(out)))
        "w1": jax.random.uniform(ks[0], (IN_CHANNEL, HID), jnp.float32, -stdv1, stdv1),
        "w2": jax.random.uniform(ks[1], (HID, FEAT), jnp.float32, -stdv2, stdv2),
        # GTLayer(first=True) channel-mix weights (two GTConvs, out_channels=1)
        "gtw1": 0.1 * jax.random.normal(ks[2], (1, N_ADJ), jnp.float32),
        "gtw2": 0.1 * jax.random.normal(ks[3], (1, N_ADJ), jnp.float32),
        # stand-in backbone: pointwise conv weight / bias
        "wc": 0.1 * jax.random.normal(ks[4], (C_IMG, FEAT), jnp.float32),
        "bc": 0.1 * jax.random.normal(ks[5], (1, FEAT), jnp.float32),
    }
    # A_Tensor: identity channel + synthetic symmetric nonnegative adjacencies
    chans = [jnp.eye(NUM_CLASSES, dtype=jnp.float32)]
    for i in range(N_ADJ - 1):
        m = jax.random.uniform(ks[6 + i], (NUM_CLASSES, NUM_CLASSES), jnp.float32)
        chans.append(0.5 * (m + m.T))
    params["A"] = jnp.stack(chans, axis=0)                      # (N_ADJ, K, K)
    return params


if __name__ == "__main__":
    key = jax.random.PRNGKey(0)
    pkey, fkey, ikey = jax.random.split(key, 3)
    params = make_params(pkey)

    feature = jax.random.normal(fkey, (B, C_IMG, H, W), jnp.float32)   # NCHW image
    inp = jax.random.normal(ikey, (B, NUM_CLASSES, IN_CHANNEL), jnp.float32)

    out = jax.block_until_ready(gcn_resnet_forward(feature, inp, params))
    ref = jax.block_until_ready(gcn_resnet_reference(feature, inp, params))

    assert out.shape == (B, NUM_CLASSES), out.shape
    np.testing.assert_allclose(np.asarray(out), np.asarray(ref), rtol=2e-2, atol=2e-2)
    print("KERNEL_OK")
</pallas_src>

<mosaic_0001>
module attributes {stable_mosaic.version = 11 : i64} {
  func.func @gcn_resnet_kernel(%arg0: i32, %arg1: memref<8x32xf32, #tpu.memory_space<vmem>>, %arg2: memref<3x8x8xf32, #tpu.memory_space<vmem>>, %arg3: memref<2x3xf32, #tpu.memory_space<vmem>>, %arg4: memref<32x64xf32, #tpu.memory_space<vmem>>, %arg5: memref<64x128xf32, #tpu.memory_space<vmem>>, %arg6: memref<2x196x4xf32, #tpu.memory_space<vmem>>, %arg7: memref<4x128xf32, #tpu.memory_space<vmem>>, %arg8: memref<1x128xf32, #tpu.memory_space<vmem>>, %arg9: memref<2x128xf32, #tpu.memory_space<vmem>>, %arg10: memref<2x128xf32, #tpu.memory_space<vmem>>) attributes {dimension_semantics = [#tpu.dimension_semantics<parallel>], iteration_bounds = array<i64: 1>, scalar_prefetch = 0 : i64, scratch_operands = 1 : i64, tpu.core_type = #tpu.core_type<tc>, window_params = [{pipeline_mode = #tpu.pipeline_mode<synchronous>, transform_indices = @transform_0, window_bounds = array<i64: 8, 32>}, {pipeline_mode = #tpu.pipeline_mode<synchronous>, transform_indices = @transform_1, window_bounds = array<i64: 3, 8, 8>}, {pipeline_mode = #tpu.pipeline_mode<synchronous>, transform_indices = @transform_2, window_bounds = array<i64: 2, 3>}, {pipeline_mode = #tpu.pipeline_mode<synchronous>, transform_indices = @transform_3, window_bounds = array<i64: 32, 64>}, {pipeline_mode = #tpu.pipeline_mode<synchronous>, transform_indices = @transform_4, window_bounds = array<i64: 64, 128>}, {transform_indices = @transform_5, window_bounds = array<i64: 2, 196, 4>}, {pipeline_mode = #tpu.pipeline_mode<synchronous>, transform_indices = @transform_6, window_bounds = array<i64: 4, 128>}, {pipeline_mode = #tpu.pipeline_mode<synchronous>, transform_indices = @transform_7, window_bounds = array<i64: 1, 128>}, {transform_indices = @transform_8, window_bounds = array<i64: 2, 128>}]} {
    %c0 = arith.constant 0 : index
    %c0_0 = arith.constant 0 : index
    %0 = vector.load %arg3[%c0, %c0_0] : memref<2x3xf32, #tpu.memory_space<vmem>>, vector<1x3xf32>
    %cst = arith.constant dense<0xFF800000> : vector<1xf32>
    %1 = vector.multi_reduction <maximumf>, %0, %cst [1] : vector<1x3xf32> to vector<1xf32>
    %2 = vector.shape_cast %1 : vector<1xf32> to vector<1x1xf32>
    %3 = vector.broadcast %2 : vector<1x1xf32> to vector<1x3xf32>
    %4 = arith.subf %0, %3 : vector<1x3xf32>
    %5 = math.exp %4 : vector<1x3xf32>
    %cst_1 = arith.constant dense<0.000000e+00> : vector<1xf32>
    %6 = vector.multi_reduction <add>, %5, %cst_1 [1] : vector<1x3xf32> to vector<1xf32>
    %7 = vector.shape_cast %6 : vector<1xf32> to vector<1x1xf32>
    %8 = vector.broadcast %7 : vector<1x1xf32> to vector<1x3xf32>
    %9 = arith.divf %5, %8 : vector<1x3xf32>
    %c0_2 = arith.constant 0 : index
    %c0_3 = arith.constant 0 : index
    %c0_4 = arith.constant 0 : index
    %10 = vector.load %arg2[%c0_2, %c0_3, %c0_4] : memref<3x8x8xf32, #tpu.memory_space<vmem>>, vector<1x8x8xf32>
    %11 = vector.shape_cast %10 : vector<1x8x8xf32> to vector<8x8xf32>
    %12 = vector.extract_strided_slice %9 {offsets = [0, 0], sizes = [1, 1], strides = [1, 1]} : vector<1x3xf32> to vector<1x1xf32>
    %13 = vector.broadcast %12 : vector<1x1xf32> to vector<8x8xf32>
    %14 = arith.mulf %11, %13 : vector<8x8xf32>
    %c1 = arith.constant 1 : index
    %c0_5 = arith.constant 0 : index
    %c0_6 = arith.constant 0 : index
    %15 = vector.load %arg2[%c1, %c0_5, %c0_6] : memref<3x8x8xf32, #tpu.memory_space<vmem>>, vector<1x8x8xf32>
    %16 = vector.shape_cast %15 : vector<1x8x8xf32> to vector<8x8xf32>
    %17 = vector.extract_strided_slice %9 {offsets = [0, 1], sizes = [1, 1], strides = [1, 1]} : vector<1x3xf32> to vector<1x1xf32>
    %18 = vector.broadcast %17 : vector<1x1xf32> to vector<8x8xf32>
    %19 = arith.mulf %16, %18 : vector<8x8xf32>
    %20 = arith.addf %14, %19 : vector<8x8xf32>
    %c2 = arith.constant 2 : index
    %c0_7 = arith.constant 0 : index
    %c0_8 = arith.constant 0 : index
    %21 = vector.load %arg2[%c2, %c0_7, %c0_8] : memref<3x8x8xf32, #tpu.memory_space<vmem>>, vector<1x8x8xf32>
    %22 = vector.shape_cast %21 : vector<1x8x8xf32> to vector<8x8xf32>
    %23 = vector.extract_strided_slice %9 {offsets = [0, 2], sizes = [1, 1], strides = [1, 1]} : vector<1x3xf32> to vector<1x1xf32>
    %24 = vector.broadcast %23 : vector<1x1xf32> to vector<8x8xf32>
    %25 = arith.mulf %22, %24 : vector<8x8xf32>
    %26 = arith.addf %20, %25 : vector<8x8xf32>
    %c1_9 = arith.constant 1 : index
    %c0_10 = arith.constant 0 : index
    %27 = vector.load %arg3[%c1_9, %c0_10] : memref<2x3xf32, #tpu.memory_space<vmem>>, vector<1x3xf32>
    %cst_11 = arith.constant dense<0xFF800000> : vector<1xf32>
    %28 = vector.multi_reduction <maximumf>, %27, %cst_11 [1] : vector<1x3xf32> to vector<1xf32>
    %29 = vector.shape_cast %28 : vector<1xf32> to vector<1x1xf32>
    %30 = vector.broadcast %29 : vector<1x1xf32> to vector<1x3xf32>
    %31 = arith.subf %27, %30 : vector<1x3xf32>
    %32 = math.exp %31 : vector<1x3xf32>
    %cst_12 = arith.constant dense<0.000000e+00> : vector<1xf32>
    %33 = vector.multi_reduction <add>, %32, %cst_12 [1] : vector<1x3xf32> to vector<1xf32>
    %34 = vector.shape_cast %33 : vector<1xf32> to vector<1x1xf32>
    %35 = vector.broadcast %34 : vector<1x1xf32> to vector<1x3xf32>
    %36 = arith.divf %32, %35 : vector<1x3xf32>
    %c0_13 = arith.constant 0 : index
    %c0_14 = arith.constant 0 : index
    %c0_15 = arith.constant 0 : index
    %37 = vector.load %arg2[%c0_13, %c0_14, %c0_15] : memref<3x8x8xf32, #tpu.memory_space<vmem>>, vector<1x8x8xf32>
    %38 = vector.shape_cast %37 : vector<1x8x8xf32> to vector<8x8xf32>
    %39 = vector.extract_strided_slice %36 {offsets = [0, 0], sizes = [1, 1], strides = [1, 1]} : vector<1x3xf32> to vector<1x1xf32>
    %40 = vector.broadcast %39 : vector<1x1xf32> to vector<8x8xf32>
    %41 = arith.mulf %38, %40 : vector<8x8xf32>
    %c1_16 = arith.constant 1 : index
    %c0_17 = arith.constant 0 : index
    %c0_18 = arith.constant 0 : index
    %42 = vector.load %arg2[%c1_16, %c0_17, %c0_18] : memref<3x8x8xf32, #tpu.memory_space<vmem>>, vector<1x8x8xf32>
    %43 = vector.shape_cast %42 : vector<1x8x8xf32> to vector<8x8xf32>
    %44 = vector.extract_strided_slice %36 {offsets = [0, 1], sizes = [1, 1], strides = [1, 1]} : vector<1x3xf32> to vector<1x1xf32>
    %45 = vector.broadcast %44 : vector<1x1xf32> to vector<8x8xf32>
    %46 = arith.mulf %43, %45 : vector<8x8xf32>
    %47 = arith.addf %41, %46 : vector<8x8xf32>
    %c2_19 = arith.constant 2 : index
    %c0_20 = arith.constant 0 : index
    %c0_21 = arith.constant 0 : index
    %48 = vector.load %arg2[%c2_19, %c0_20, %c0_21] : memref<3x8x8xf32, #tpu.memory_space<vmem>>, vector<1x8x8xf32>
    %49 = vector.shape_cast %48 : vector<1x8x8xf32> to vector<8x8xf32>
    %50 = vector.extract_strided_slice %36 {offsets = [0, 2], sizes = [1, 1], strides = [1, 1]} : vector<1x3xf32> to vector<1x1xf32>
    %51 = vector.broadcast %50 : vector<1x1xf32> to vector<8x8xf32>
    %52 = arith.mulf %49, %51 : vector<8x8xf32>
    %53 = arith.addf %47, %52 : vector<8x8xf32>
    %cst_22 = arith.constant dense<0.000000e+00> : vector<8x8xf32>
    %54 = tpu.matmul %26, %53, %cst_22 {dimension_numbers = #tpu.dot_dimension_numbers<[1], [0], [0], [1], [0, 0, 1, 1], [], []>} : vector<8x8xf32>, vector<8x8xf32>, vector<8x8xf32> -> vector<8x8xf32>
    %55 = tpu.iota {dimensions = array<i32: 0>} : vector<8x8xi32>
    %56 = tpu.iota {dimensions = array<i32: 1>} : vector<8x8xi32>
    %57 = arith.cmpi eq, %55, %56 : vector<8x8xi32>
    %cst_23 = arith.constant 1.000000e+00 : f32
    %cst_24 = arith.constant 0.000000e+00 : f32
    %58 = vector.broadcast %cst_23 : f32 to vector<8x8xf32>
    %59 = vector.broadcast %cst_24 : f32 to vector<8x8xf32>
    %60 = arith.select %57, %58, %59 : vector<8x8xi1>, vector<8x8xf32>
    %61 = arith.addf %54, %60 : vector<8x8xf32>
    %cst_25 = arith.constant dense<0.000000e+00> : vector<8xf32>
    %62 = vector.multi_reduction <add>, %61, %cst_25 [1] : vector<8x8xf32> to vector<8xf32>
    %63 = vector.shape_cast %62 : vector<8xf32> to vector<8x1xf32>
    %64 = math.rsqrt %63 : vector<8x1xf32>
    %65 = tpu.transpose %61, [1, 0] : vector<8x8xf32> -> vector<8x8xf32>
    %66 = vector.broadcast %64 : vector<8x1xf32> to vector<8x8xf32>
    %67 = arith.mulf %66, %65 : vector<8x8xf32>
    %68 = tpu.transpose %64, [1, 0] : vector<8x1xf32> -> vector<1x8xf32>
    %69 = vector.broadcast %68 : vector<1x8xf32> to vector<8x8xf32>
    %70 = arith.mulf %67, %69 : vector<8x8xf32>
    %c0_26 = arith.constant 0 : index
    %c0_27 = arith.constant 0 : index
    %71 = vector.load %arg1[%c0_26, %c0_27] : memref<8x32xf32, #tpu.memory_space<vmem>>, vector<8x32xf32>
    %c0_28 = arith.constant 0 : index
    %c0_29 = arith.constant 0 : index
    %72 = vector.load %arg4[%c0_28, %c0_29] : memref<32x64xf32, #tpu.memory_space<vmem>>, vector<32x64xf32>
    %cst_30 = arith.constant dense<0.000000e+00> : vector<8x64xf32>
    %73 = tpu.matmul %71, %72, %cst_30 {dimension_numbers = #tpu.dot_dimension_numbers<[1], [0], [0], [1], [0, 0, 1, 1], [], []>} : vector<8x32xf32>, vector<32x64xf32>, vector<8x64xf32> -> vector<8x64xf32>
    %cst_31 = arith.constant dense<0.000000e+00> : vector<8x64xf32>
    %74 = tpu.matmul %70, %73, %cst_31 {dimension_numbers = #tpu.dot_dimension_numbers<[1], [0], [0], [1], [0, 0, 1, 1], [], []>} : vector<8x8xf32>, vector<8x64xf32>, vector<8x64xf32> -> vector<8x64xf32>
    %cst_32 = arith.constant 0.000000e+00 : f32
    %75 = vector.broadcast %cst_32 : f32 to vector<8x64xf32>
    %76 = arith.cmpf ogt, %74, %75 : vector<8x64xf32>
    %cst_33 = arith.constant 2.000000e-01 : f32
    %77 = vector.broadcast %cst_33 : f32 to vector<8x64xf32>
    %78 = arith.mulf %77, %74 : vector<8x64xf32>
    %79 = arith.select %76, %74, %78 : vector<8x64xi1>, vector<8x64xf32>
    %c0_34 = arith.constant 0 : index
    %c0_35 = arith.constant 0 : index
    %80 = vector.load %arg5[%c0_34, %c0_35] : memref<64x128xf32, #tpu.memory_space<vmem>>, vector<64x128xf32>
    %cst_36 = arith.constant dense<0.000000e+00> : vector<8x128xf32>
    %81 = tpu.matmul %79, %80, %cst_36 {dimension_numbers = #tpu.dot_dimension_numbers<[1], [0], [0], [1], [0, 0, 1, 1], [], []>} : vector<8x64xf32>, vector<64x128xf32>, vector<8x128xf32> -> vector<8x128xf32>
    %cst_37 = arith.constant dense<0.000000e+00> : vector<8x128xf32>
    %82 = tpu.matmul %70, %81, %cst_37 {dimension_numbers = #tpu.dot_dimension_numbers<[1], [0], [0], [1], [0, 0, 1, 1], [], []>} : vector<8x8xf32>, vector<8x128xf32>, vector<8x128xf32> -> vector<8x128xf32>
    %cst_38 = arith.constant 0.000000e+00 : f32
    %83 = vector.broadcast %cst_38 : f32 to vector<120x128xf32>
    %84 = tpu.concatenate %82, %83 in 0 : vector<8x128xf32>, vector<120x128xf32> -> vector<128x128xf32>
    %85 = tpu.transpose %84, [1, 0] : vector<128x128xf32> -> vector<128x128xf32>
    %c0_39 = arith.constant 0 : index
    %c0_40 = arith.constant 0 : index
    %86 = vector.load %arg7[%c0_39, %c0_40] : memref<4x128xf32, #tpu.memory_space<vmem>>, vector<4x128xf32>
    %c0_41 = arith.constant 0 : index
    %c0_42 = arith.constant 0 : index
    %87 = vector.load %arg8[%c0_41, %c0_42] : memref<1x128xf32, #tpu.memory_space<vmem>>, vector<1x128xf32>
    %c0_43 = arith.constant 0 : index
    %c0_44 = arith.constant 0 : index
    %c0_45 = arith.constant 0 : index
    %88 = vector.load %arg6[%c0_43, %c0_44, %c0_45] : memref<2x196x4xf32, #tpu.memory_space<vmem>>, vector<1x196x4xf32>
    %89 = vector.shape_cast %88 : vector<1x196x4xf32> to vector<196x4xf32>
    %90 = vector.extract_strided_slice %89 {offsets = [0, 0], sizes = [196, 1], strides = [1, 1]} : vector<196x4xf32> to vector<196x1xf32>
    %91 = vector.extract_strided_slice %86 {offsets = [0, 0], sizes = [1, 128], strides = [1, 1]} : vector<4x128xf32> to vector<1x128xf32>
    %92 = vector.broadcast %90 : vector<196x1xf32> to vector<196x128xf32>
    %93 = vector.broadcast %91 : vector<1x128xf32> to vector<196x128xf32>
    %94 = arith.mulf %92, %93 : vector<196x128xf32>
    %95 = vector.extract_strided_slice %89 {offsets = [0, 1], sizes = [196, 1], strides = [1, 1]} : vector<196x4xf32> to vector<196x1xf32>
    %96 = vector.extract_strided_slice %86 {offsets = [1, 0], sizes = [1, 128], strides = [1, 1]} : vector<4x128xf32> to vector<1x128xf32>
    %97 = vector.broadcast %95 : vector<196x1xf32> to vector<196x128xf32>
    %98 = vector.broadcast %96 : vector<1x128xf32> to vector<196x128xf32>
    %99 = arith.mulf %97, %98 : vector<196x128xf32>
    %100 = arith.addf %94, %99 : vector<196x128xf32>
    %101 = vector.extract_strided_slice %89 {offsets = [0, 2], sizes = [196, 1], strides = [1, 1]} : vector<196x4xf32> to vector<196x1xf32>
    %102 = vector.extract_strided_slice %86 {offsets = [2, 0], sizes = [1, 128], strides = [1, 1]} : vector<4x128xf32> to vector<1x128xf32>
    %103 = vector.broadcast %101 : vector<196x1xf32> to vector<196x128xf32>
    %104 = vector.broadcast %102 : vector<1x128xf32> to vector<196x128xf32>
    %105 = arith.mulf %103, %104 : vector<196x128xf32>
    %106 = arith.addf %100, %105 : vector<196x128xf32>
    %107 = vector.extract_strided_slice %89 {offsets = [0, 3], sizes = [196, 1], strides = [1, 1]} : vector<196x4xf32> to vector<196x1xf32>
    %108 = vector.extract_strided_slice %86 {offsets = [3, 0], sizes = [1, 128], strides = [1, 1]} : vector<4x128xf32> to vector<1x128xf32>
    %109 = vector.broadcast %107 : vector<196x1xf32> to vector<196x128xf32>
    %110 = vector.broadcast %108 : vector<1x128xf32> to vector<196x128xf32>
    %111 = arith.mulf %109, %110 : vector<196x128xf32>
    %112 = arith.addf %106, %111 : vector<196x128xf32>
    %113 = vector.broadcast %87 : vector<1x128xf32> to vector<196x128xf32>
    %114 = arith.addf %112, %113 : vector<196x128xf32>
    %cst_46 = arith.constant 0.000000e+00 : f32
    %115 = vector.broadcast %cst_46 : f32 to vector<196x128xf32>
    %116 = arith.maximumf %114, %115 : vector<196x128xf32>
    %cst_47 = arith.constant dense<0xFF800000> : vector<128xf32>
    %117 = vector.multi_reduction <maximumf>, %116, %cst_47 [0] : vector<196x128xf32> to vector<128xf32>
    %118 = vector.shape_cast %117 : vector<128xf32> to vector<1x128xf32>
    %c0_48 = arith.constant 0 : index
    %c0_49 = arith.constant 0 : index
    %119 = vector.load %arg10[%c0_48, %c0_49] : memref<2x128xf32, #tpu.memory_space<vmem>>, vector<1x128xf32>
    tpu.vector_store %arg10[%c0_48, %c0_49], %118 {strides = array<i32>} : memref<2x128xf32, #tpu.memory_space<vmem>>, vector<1x128xf32>,
    %c1_50 = arith.constant 1 : index
    %c0_51 = arith.constant 0 : index
    %c0_52 = arith.constant 0 : index
    %120 = vector.load %arg6[%c1_50, %c0_51, %c0_52] : memref<2x196x4xf32, #tpu.memory_space<vmem>>, vector<1x196x4xf32>
    %121 = vector.shape_cast %120 : vector<1x196x4xf32> to vector<196x4xf32>
    %122 = vector.extract_strided_slice %121 {offsets = [0, 0], sizes = [196, 1], strides = [1, 1]} : vector<196x4xf32> to vector<196x1xf32>
    %123 = vector.extract_strided_slice %86 {offsets = [0, 0], sizes = [1, 128], strides = [1, 1]} : vector<4x128xf32> to vector<1x128xf32>
    %124 = vector.broadcast %122 : vector<196x1xf32> to vector<196x128xf32>
    %125 = vector.broadcast %123 : vector<1x128xf32> to vector<196x128xf32>
    %126 = arith.mulf %124, %125 : vector<196x128xf32>
    %127 = vector.extract_strided_slice %121 {offsets = [0, 1], sizes = [196, 1], strides = [1, 1]} : vector<196x4xf32> to vector<196x1xf32>
    %128 = vector.extract_strided_slice %86 {offsets = [1, 0], sizes = [1, 128], strides = [1, 1]} : vector<4x128xf32> to vector<1x128xf32>
    %129 = vector.broadcast %127 : vector<196x1xf32> to vector<196x128xf32>
    %130 = vector.broadcast %128 : vector<1x128xf32> to vector<196x128xf32>
    %131 = arith.mulf %129, %130 : vector<196x128xf32>
    %132 = arith.addf %126, %131 : vector<196x128xf32>
    %133 = vector.extract_strided_slice %121 {offsets = [0, 2], sizes = [196, 1], strides = [1, 1]} : vector<196x4xf32> to vector<196x1xf32>
    %134 = vector.extract_strided_slice %86 {offsets = [2, 0], sizes = [1, 128], strides = [1, 1]} : vector<4x128xf32> to vector<1x128xf32>
    %135 = vector.broadcast %133 : vector<196x1xf32> to vector<196x128xf32>
    %136 = vector.broadcast %134 : vector<1x128xf32> to vector<196x128xf32>
    %137 = arith.mulf %135, %136 : vector<196x128xf32>
    %138 = arith.addf %132, %137 : vector<196x128xf32>
    %139 = vector.extract_strided_slice %121 {offsets = [0, 3], sizes = [196, 1], strides = [1, 1]} : vector<196x4xf32> to vector<196x1xf32>
    %140 = vector.extract_strided_slice %86 {offsets = [3, 0], sizes = [1, 128], strides = [1, 1]} : vector<4x128xf32> to vector<1x128xf32>
    %141 = vector.broadcast %139 : vector<196x1xf32> to vector<196x128xf32>
    %142 = vector.broadcast %140 : vector<1x128xf32> to vector<196x128xf32>
    %143 = arith.mulf %141, %142 : vector<196x128xf32>
    %144 = arith.addf %138, %143 : vector<196x128xf32>
    %145 = vector.broadcast %87 : vector<1x128xf32> to vector<196x128xf32>
    %146 = arith.addf %144, %145 : vector<196x128xf32>
    %cst_53 = arith.constant 0.000000e+00 : f32
    %147 = vector.broadcast %cst_53 : f32 to vector<196x128xf32>
    %148 = arith.maximumf %146, %147 : vector<196x128xf32>
    %cst_54 = arith.constant dense<0xFF800000> : vector<128xf32>
    %149 = vector.multi_reduction <maximumf>, %148, %cst_54 [0] : vector<196x128xf32> to vector<128xf32>
    %150 = vector.shape_cast %149 : vector<128xf32> to vector<1x128xf32>
    %c1_55 = arith.constant 1 : index
    %c0_56 = arith.constant 0 : index
    %151 = vector.load %arg10[%c1_55, %c0_56] : memref<2x128xf32, #tpu.memory_space<vmem>>, vector<1x128xf32>
    tpu.vector_store %arg10[%c1_55, %c0_56], %150 {strides = array<i32>} : memref<2x128xf32, #tpu.memory_space<vmem>>, vector<1x128xf32>,
    %c0_57 = arith.constant 0 : index
    %c0_58 = arith.constant 0 : index
    %152 = vector.load %arg10[%c0_57, %c0_58] : memref<2x128xf32, #tpu.memory_space<vmem>>, vector<2x128xf32>
    %cst_59 = arith.constant dense<0.000000e+00> : vector<2x128xf32>
    %153 = tpu.matmul %152, %85, %cst_59 {dimension_numbers = #tpu.dot_dimension_numbers<[1], [0], [0], [1], [0, 0, 1, 1], [], []>} : vector<2x128xf32>, vector<128x128xf32>, vector<2x128xf32> -> vector<2x128xf32>
    %c0_60 = arith.constant 0 : index
    %c0_61 = arith.constant 0 : index
    %154 = vector.load %arg9[%c0_60, %c0_61] : memref<2x128xf32, #tpu.memory_space<vmem>>, vector<2x128xf32>
    tpu.vector_store %arg9[%c0_60, %c0_61], %153 {strides = array<i32>} : memref<2x128xf32, #tpu.memory_space<vmem>>, vector<2x128xf32>,
    return
  }
  func.func @transform_0(%arg0: i32) -> (i32, i32) {
    %c0_i32 = arith.constant 0 : i32
    %c0_i32_0 = arith.constant 0 : i32
    %c0_i32_1 = arith.constant 0 : i32
    return %c0_i32, %c0_i32_0 : i32, i32
  }
  func.func @transform_1(%arg0: i32) -> (i32, i32, i32) {
    %c0_i32 = arith.constant 0 : i32
    %c0_i32_0 = arith.constant 0 : i32
    %c0_i32_1 = arith.constant 0 : i32
    %c0_i32_2 = arith.constant 0 : i32
    return %c0_i32, %c0_i32_0, %c0_i32_1 : i32, i32, i32
  }
  func.func @transform_2(%arg0: i32) -> (i32, i32) {
    %c0_i32 = arith.constant 0 : i32
    %c0_i32_0 = arith.constant 0 : i32
    %c0_i32_1 = arith.constant 0 : i32
    return %c0_i32, %c0_i32_0 : i32, i32
  }
  func.func @transform_3(%arg0: i32) -> (i32, i32) {
    %c0_i32 = arith.constant 0 : i32
    %c0_i32_0 = arith.constant 0 : i32
    %c0_i32_1 = arith.constant 0 : i32
    return %c0_i32, %c0_i32_0 : i32, i32
  }
  func.func @transform_4(%arg0: i32) -> (i32, i32) {
    %c0_i32 = arith.constant 0 : i32
    %c0_i32_0 = arith.constant 0 : i32
    %c0_i32_1 = arith.constant 0 : i32
    return %c0_i32, %c0_i32_0 : i32, i32
  }
  func.func @transform_5(%arg0: i32) -> (i32, i32, i32) {
    %c0_i32 = arith.constant 0 : i32
    %c0_i32_0 = arith.constant 0 : i32
    %c0_i32_1 = arith.constant 0 : i32
    return %arg0, %c0_i32, %c0_i32_0 : i32, i32, i32
  }
  func.func @transform_6(%arg0: i32) -> (i32, i32) {
    %c0_i32 = arith.constant 0 : i32
    %c0_i32_0 = arith.constant 0 : i32
    %c0_i32_1 = arith.constant 0 : i32
    return %c0_i32, %c0_i32_0 : i32, i32
  }
  func.func @transform_7(%arg0: i32) -> (i32, i32) {
    %c0_i32 = arith.constant 0 : i32
    %c0_i32_0 = arith.constant 0 : i32
    %c0_i32_1 = arith.constant 0 : i32
    return %c0_i32, %c0_i32_0 : i32, i32
  }
  func.func @transform_8(%arg0: i32) -> (i32, i32) {
    %c0_i32 = arith.constant 0 : i32
    %c0_i32_0 = arith.constant 0 : i32
    return %arg0, %c0_i32 : i32, i32
  }
}

</mosaic_0001>

<llo_original>
// kernel: tpu_custom_call.1
$region0: #{tpu_custom_call.1}
  #allocation0 [shape = 'u32[]', space=smem, size = 0x4, offset = 0x4, fixed_abs, tag = 'smem constant byte address 0x4 - core index']
  #allocation1 [shape = 'u32[144,128]{1,0:T(1,128)}', space=vmem, size = 0x12000, scoped, tag = 'internal scratch']
  #allocation2 [shape = 'f32[2,128]{1,0:T(2,128)}', space=vmem, size = 0x400, scoped, tag = 'scratch operand']
  %s0 = inlined_call_operand.vmem [shape: f32[8,32], index: 0, kind: input, shape index: {}]
  %s1 = inlined_call_operand.vmem [shape: f32[3,8,8], index: 1, kind: input, shape index: {}]
  %s2 = inlined_call_operand.vmem [shape: f32[2,3], index: 2, kind: input, shape index: {}]
  %s3 = inlined_call_operand.vmem [shape: f32[32,64], index: 3, kind: input, shape index: {}]
  %s4 = inlined_call_operand.vmem [shape: f32[64,128], index: 4, kind: input, shape index: {}]
  %s5 = inlined_call_operand.vmem [shape: f32[2,196,4], index: 5, kind: input, shape index: {}]
  %s6 = inlined_call_operand.vmem [shape: f32[4,128], index: 6, kind: input, shape index: {}]
  %s7 = inlined_call_operand.vmem [shape: f32[1,128], index: 7, kind: input, shape index: {}]
  %s8 = inlined_call_operand.hbm [shape: f32[2,128], index: 8, kind: output, shape index: {}]
  %s9 = sld [smem:[#allocation0]]
  $region42: #{tpu_custom_call.1} parent=0
    _
  %s11 = ssub.s32 1, %s9
  %s12 = scalar_select 0, %s11, %s9
  $region1: #{tpu_custom_call.1} parent=0
    #allocation3 [shape = 'u8[1024]{0}', space=vmem, size = 0x400, scoped, tag = 'output window, operand 0, single buffered']
    #allocation4 [shape = 's32[1]{0}', space=sflag, size = 0x4, scoped, tag = 'scoped memory for tpu_custom_call.1']
    %13 = vsyncpa [#allocation4], 0
    // Predicated region
    $region2: #{tpu_custom_call.1} parent=1 // pred_check
      _
    $region3: #{tpu_custom_call.1} parent=1 // pred_check_branch
      %15 = sbr.rel (0) target = $region5
    $region4: #{tpu_custom_call.1} parent=1 // pred_region
      _
    $region5: #{tpu_custom_call.1} parent=1 // pred_fallthru
      _
    // Predicated region
    $region6: #{tpu_custom_call.1} parent=1 // pred_check
      _
    $region7: #{tpu_custom_call.1} parent=1 // pred_check_branch
      %17 = sbr.rel (0) target = $region9
    $region8: #{tpu_custom_call.1} parent=1 // pred_region
      _
    $region9: #{tpu_custom_call.1} parent=1 // pred_fallthru
      _
    // Predicated region
    $region10: #{tpu_custom_call.1} parent=1 // pred_check
      _
    $region11: #{tpu_custom_call.1} parent=1 // pred_check_branch
      %19 = sbr.rel (0) target = $region13
    $region12: #{tpu_custom_call.1} parent=1 // pred_region
      _
    $region13: #{tpu_custom_call.1} parent=1 // pred_fallthru
      _
    // Predicated region
    $region14: #{tpu_custom_call.1} parent=1 // pred_check
      _
    $region15: #{tpu_custom_call.1} parent=1 // pred_check_branch
      %21 = sbr.rel (0) target = $region17
    $region16: #{tpu_custom_call.1} parent=1 // pred_region
      _
    $region17: #{tpu_custom_call.1} parent=1 // pred_fallthru
      _
    // Predicated region
    $region18: #{tpu_custom_call.1} parent=1 // pred_check
      _
    $region19: #{tpu_custom_call.1} parent=1 // pred_check_branch
      %23 = sbr.rel (0) target = $region21
    $region20: #{tpu_custom_call.1} parent=1 // pred_region
      _
    $region21: #{tpu_custom_call.1} parent=1 // pred_fallthru
      _
    // Predicated region
    $region22: #{tpu_custom_call.1} parent=1 // pred_check
      _
    $region23: #{tpu_custom_call.1} parent=1 // pred_check_branch
      %25 = sbr.rel (0) target = $region25
    $region24: #{tpu_custom_call.1} parent=1 // pred_region
      _
    $region25: #{tpu_custom_call.1} parent=1 // pred_fallthru
      _
    // Predicated region
    $region26: #{tpu_custom_call.1} parent=1 // pred_check
      _
    $region27: #{tpu_custom_call.1} parent=1 // pred_check_branch
      %27 = sbr.rel (0) target = $region29
    $region28: #{tpu_custom_call.1} parent=1 // pred_region
      _
    $region29: #{tpu_custom_call.1} parent=1 // pred_fallthru
      _
    // Predicated region
    $region30: #{tpu_custom_call.1} parent=1 // pred_check
      _
    $region31: #{tpu_custom_call.1} parent=1 // pred_check_branch
      %29 = sbr.rel (0) target = $region33
    $region32: #{tpu_custom_call.1} parent=1 // pred_region
      _
    $region33: #{tpu_custom_call.1} parent=1 // pred_fallthru
      _
    %v30 = vld [vmem:[%s2] sm:$0x1]
    %vm31 = vcmask 16384
    %v32 = vsel %vm31, %v30, -inf
    %33 = vmax.xlane.f32.xlu0 %v32
    %v34 = vpop.xlane.xlu0 %33
    %v35 = vsub.f32 %v30, %v34
    %v36 = vmul.f32 %v35, 1.442695
    %v37 = vpow.pop %v36
    %v38 = vsel %vm31, %v37, 0.0
    %39 = vadd.xlane.f32.xlu0 %v38
    %v40 = vpop.xlane.xlu0 %39
    %v41 = vrcp.pop %v40
    %v42 = vmul.f32 %v37, %v41
    %v43 = vld [vmem:[%s1] sm:$0xff]
    %s45 = vtos %v42
    %v46 = vstv %s45
    %v48 = vmul.f32 %v43, %v46
    %s49 = scalar_lea.vmem %s1, 8
    %v50 = vld [vmem:[%s49] sm:$0xff]
    %51 = vrot.lane.b32.xlu0 %v42, 127
    %v52 = vpop.permute.xlu0 %51
    %s53 = vtos %v52
    %v54 = vstv %s53
    %v56 = vmul.f32 %v50, %v54
    %v57 = vadd.f32 %v48, %v56
    %s58 = scalar_lea.vmem %s1, 16
    %v59 = vld [vmem:[%s58] sm:$0xff]
    %60 = vrot.lane.b32.xlu0 %v42, 126
    %v61 = vpop.permute.xlu0 %60
    %s62 = vtos %v61
    %v63 = vstv %s62
    %v65 = vmul.f32 %v59, %v63
    %v66 = vadd.f32 %v57, %v65
    %v67 = vld [vmem:[%s2 + $0x1] sm:$0x1]
    %v68 = vsel %vm31, %v67, -inf
    %69 = vmax.xlane.f32.xlu0 %v68
    %v70 = vpop.xlane.xlu0 %69
    %v71 = vsub.f32 %v67, %v70
    %v72 = vmul.f32 %v71, 1.442695
    %v73 = vpow.pop %v72
    %v74 = vsel %vm31, %v73, 0.0
    %75 = vadd.xlane.f32.xlu0 %v74
    %v76 = vpop.xlane.xlu0 %75
    %v77 = vrcp.pop %v76
    %v78 = vmul.f32 %v73, %v77
    %s80 = vtos %v78
    %v81 = vstv %s80
    %v83 = vmul.f32 %v43, %v81
    %84 = vrot.lane.b32.xlu0 %v78, 127
    %v85 = vpop.permute.xlu0 %84
    %s86 = vtos %v85
    %v87 = vstv %s86
    %v89 = vmul.f32 %v50, %v87
    %v90 = vadd.f32 %v83, %v89
    %91 = vrot.lane.b32.xlu0 %v78, 126
    %v92 = vpop.permute.xlu0 %91
    %s93 = vtos %v92
    %v94 = vstv %s93
    %v96 = vmul.f32 %v59, %v94
    %v97 = vadd.f32 %v90, %v96
    %v98 = vlaneseq
    %v99 = vshrl.u32 %v98, 7
    %v100 = vlaneseq
    %v101 = vand.u32 %v100, 127
    %vm102 = vcmp.eq.s32.totalorder %v99, %v101
    %v103 = vsel %vm102, 1.0, 0.0
    %vm104 = vcmask 64512
    %v106 = vsel %vm104, %v66, 0
    %108 = vmatprep.subr.mxu0 0.0
    %109 = vmatpush1.msra.mxu0 %v97
    %110 = vmatprep.subr.mxu0 0.0
    %111 = vmatpush1.msra.mxu0 0.0
    %112 = vmatprep.subr.mxu0 0.0
    %113 = vmatpush1.msra.mxu0 0.0
    %114 = vmatprep.subr.mxu0 0.0
    %115 = vmatpush1.msra.mxu0 0.0
    %116 = vmatprep.subr.mxu0 0.0
    %117 = vmatpush1.msra.mxu0 0.0
    %118 = vmatprep.subr.mxu0 0.0
    %119 = vmatpush1.msra.mxu0 0.0
    %120 = vmatprep.subr.mxu0 0.0
    %121 = vmatpush1.msra.mxu0 0.0
    %122 = vmatprep.subr.mxu0 0.0
    %123 = vmatpush1.msra.mxu0 0.0
    %124 = vmatprep.subr.mxu0 0.0
    %125 = vmatpush1.msra.mxu0 0.0
    %126 = vmatprep.subr.mxu0 0.0
    %127 = vmatpush1.msra.mxu0 0.0
    %128 = vmatprep.subr.mxu0 0.0
    %129 = vmatpush1.msra.mxu0 0.0
    %130 = vmatprep.subr.mxu0 0.0
    %131 = vmatpush1.msra.mxu0 0.0
    %132 = vmatprep.subr.mxu0 0.0
    %133 = vmatpush1.msra.mxu0 0.0
    %134 = vmatprep.subr.mxu0 0.0
    %135 = vmatpush1.msra.mxu0 0.0
    %136 = vmatprep.subr.mxu0 0.0
    %137 = vmatpush1.msra.mxu0 0.0
    %138 = vmatprep.subr.mxu0 0.0
    %139 = vmatpush1.msra.mxu0 0.0
    %140 = vmatprep.subr.mxu0 0.0
    %141 = vmatpush1.msra.mxu0 0.0
    %142 = vmatprep.subr.mxu0 0.0
    %143 = vmatpush1.msra.mxu0 0.0
    %144 = vmatprep.subr.mxu0 0.0
    %145 = vmatpush1.msra.mxu0 0.0
    %146 = vmatprep.subr.mxu0 0.0
    %147 = vmatpush1.msra.mxu0 0.0
    %148 = vmatprep.subr.mxu0 0.0
    %149 = vmatpush1.msra.mxu0 0.0
    %150 = vmatprep.subr.mxu0 0.0
    %151 = vmatpush1.msra.mxu0 0.0
    %152 = vmatprep.subr.mxu0 0.0
    %153 = vmatpush1.msra.mxu0 0.0
    %154 = vmatprep.subr.mxu0 0.0
    %155 = vmatpush1.msra.mxu0 0.0
    %156 = vmatprep.subr.mxu0 0.0
    %157 = vmatpush1.msra.mxu0 0.0
    %158 = vmatprep.subr.mxu0 0.0
    %159 = vmatpush1.msra.mxu0 0.0
    %160 = vmatprep.subr.mxu0 0.0
    %161 = vmatpush1.msra.mxu0 0.0
    %162 = vmatprep.subr.mxu0 0.0
    %163 = vmatpush1.msra.mxu0 0.0
    %164 = vmatprep.subr.mxu0 0.0
    %165 = vmatpush1.msra.mxu0 0.0
    %166 = vmatprep.subr.mxu0 0.0
    %167 = vmatpush1.msra.mxu0 0.0
    %168 = vmatprep.subr.mxu0 0.0
    %169 = vmatpush1.msra.mxu0 0.0
    %170 = vmatprep.subr.mxu0 0.0
    %171 = vmatpush1.msra.mxu0 0.0
    %172 = vmatprep.mubr.f32.mxu0 0.0
    %173 = vmatmul.mubr.f32.gmra.mrb[0].mxu0 %v106
    %v174 = vpop.f32.mrb[0].mxu0
    %v175 = vadd.f32 %v103, %v174
    %v176 = vpop.f32.mrb[0].mxu0
    %177 = vdwg.mxu0
    %v178 = vsel %vm104, %v175, 0.0
    %179 = vadd.xlane.f32.xlu0 %v178
    %v180 = vpop.xlane.xlu0 %179
    %v181 = vrsqrt.pop %v180
    %182 = vxpose.xlu0.b32.start [1/16] %v175, 128
    %183 = vxpose.xlu0.b32.cont [2/16] 0.0, 128
    %184 = vxpose.xlu0.b32.cont [3/16] 0.0, 128
    %185 = vxpose.xlu0.b32.cont [4/16] 0.0, 128
    %186 = vxpose.xlu0.b32.cont [5/16] 0.0, 128
    %187 = vxpose.xlu0.b32.cont [6/16] 0.0, 128
    %188 = vxpose.xlu0.b32.cont [7/16] 0.0, 128
    %189 = vxpose.xlu0.b32.cont [8/16] 0.0, 128
    %190 = vxpose.xlu0.b32.cont [9/16] 0.0, 128
    %191 = vxpose.xlu0.b32.cont [10/16] 0.0, 128
    %192 = vxpose.xlu0.b32.cont [11/16] 0.0, 128
    %193 = vxpose.xlu0.b32.cont [12/16] 0.0, 128
    %194 = vxpose.xlu0.b32.cont [13/16] 0.0, 128
    %195 = vxpose.xlu0.b32.cont [14/16] 0.0, 128
    %196 = vxpose.xlu0.b32.cont [15/16] 0.0, 128
    %197 = vxpose.xlu0.b32.end [16/16] 0.0, 128
    %v198 = vpop.trf.xlu0
    %v199 = vpop.trf.xlu0
    %v200 = vpop.trf.xlu0
    %v201 = vpop.trf.xlu0
    %v202 = vpop.trf.xlu0
    %v203 = vpop.trf.xlu0
    %v204 = vpop.trf.xlu0
    %v205 = vpop.trf.xlu0
    %v206 = vpop.trf.xlu0
    %v207 = vpop.trf.xlu0
    %v208 = vpop.trf.xlu0
    %v209 = vpop.trf.xlu0
    %v210 = vpop.trf.xlu0
    %v211 = vpop.trf.xlu0
    %v212 = vpop.trf.xlu0
    %v213 = vpop.trf.xlu0
    %v214 = vmul.f32 %v181, %v198
    %215 = vxpose.xlu0.b32.start [1/16] %v181, 128
    %216 = vxpose.xlu0.b32.cont [2/16] 0.0, 128
    %217 = vxpose.xlu0.b32.cont [3/16] 0.0, 128
    %218 = vxpose.xlu0.b32.cont [4/16] 0.0, 128
    %219 = vxpose.xlu0.b32.cont [5/16] 0.0, 128
    %220 = vxpose.xlu0.b32.cont [6/16] 0.0, 128
    %221 = vxpose.xlu0.b32.cont [7/16] 0.0, 128
    %222 = vxpose.xlu0.b32.cont [8/16] 0.0, 128
    %223 = vxpose.xlu0.b32.cont [9/16] 0.0, 128
    %224 = vxpose.xlu0.b32.cont [10/16] 0.0, 128
    %225 = vxpose.xlu0.b32.cont [11/16] 0.0, 128
    %226 = vxpose.xlu0.b32.cont [12/16] 0.0, 128
    %227 = vxpose.xlu0.b32.cont [13/16] 0.0, 128
    %228 = vxpose.xlu0.b32.cont [14/16] 0.0, 128
    %229 = vxpose.xlu0.b32.cont [15/16] 0.0, 128
    %230 = vxpose.xlu0.b32.end [16/16] 0.0, 128
    %v231 = vpop.trf.xlu0
    %v232 = vpop.trf.xlu0
    %v233 = vpop.trf.xlu0
    %v234 = vpop.trf.xlu0
    %v235 = vpop.trf.xlu0
    %v236 = vpop.trf.xlu0
    %v237 = vpop.trf.xlu0
    %v238 = vpop.trf.xlu0
    %v239 = vpop.trf.xlu0
    %v240 = vpop.trf.xlu0
    %v241 = vpop.trf.xlu0
    %v242 = vpop.trf.xlu0
    %v243 = vpop.trf.xlu0
    %v244 = vpop.trf.xlu0
    %v245 = vpop.trf.xlu0
    %v246 = vpop.trf.xlu0
    %v247 = vlaneseq
    %v248 = vshrl.u32 %v247, 7
    %v249 = vsub.s32 0, %v248
    %v250 = vrot.slane %v231, %v249
    %v251 = vmul.f32 %v214, %v250
    %v252 = vld [vmem:[%s0] sm:$0xff]
    %v253 = vld [vmem:[%s3] sm:$0xff]
    %v254 = vld [vmem:[%s3 + $0x8] sm:$0xff]
    %v255 = vld [vmem:[%s3 + $0x10] sm:$0xff]
    %v256 = vld [vmem:[%s3 + $0x18] sm:$0xff]
    %vm257 = vcmask 261120
    %v259 = vsel %vm257, %v252, 0
    %261 = vmatprep.subr.mxu0 0.0
    %262 = vmatpush1.msra.mxu0 %v253
    %263 = vmatprep.subr.mxu0 0.0
    %264 = vmatpush1.msra.mxu0 %v254
    %265 = vmatprep.subr.mxu0 0.0
    %266 = vmatpush1.msra.mxu0 %v255
    %267 = vmatprep.subr.mxu0 0.0
    %268 = vmatpush1.msra.mxu0 %v256
    %269 = vmatprep.subr.mxu0 0.0
    %270 = vmatpush1.msra.mxu0 0.0
    %271 = vmatprep.subr.mxu0 0.0
    %272 = vmatpush1.msra.mxu0 0.0
    %273 = vmatprep.subr.mxu0 0.0
    %274 = vmatpush1.msra.mxu0 0.0
    %275 = vmatprep.subr.mxu0 0.0
    %276 = vmatpush1.msra.mxu0 0.0
    %277 = vmatprep.subr.mxu0 0.0
    %278 = vmatpush1.msra.mxu0 0.0
    %279 = vmatprep.subr.mxu0 0.0
    %280 = vmatpush1.msra.mxu0 0.0
    %281 = vmatprep.subr.mxu0 0.0
    %282 = vmatpush1.msra.mxu0 0.0
    %283 = vmatprep.subr.mxu0 0.0
    %284 = vmatpush1.msra.mxu0 0.0
    %285 = vmatprep.subr.mxu0 0.0
    %286 = vmatpush1.msra.mxu0 0.0
    %287 = vmatprep.subr.mxu0 0.0
    %288 = vmatpush1.msra.mxu0 0.0
    %289 = vmatprep.subr.mxu0 0.0
    %290 = vmatpush1.msra.mxu0 0.0
    %291 = vmatprep.subr.mxu0 0.0
    %292 = vmatpush1.msra.mxu0 0.0
    %293 = vmatprep.subr.mxu0 0.0
    %294 = vmatpush1.msra.mxu0 0.0
    %295 = vmatprep.subr.mxu0 0.0
    %296 = vmatpush1.msra.mxu0 0.0
    %297 = vmatprep.subr.mxu0 0.0
    %298 = vmatpush1.msra.mxu0 0.0
    %299 = vmatprep.subr.mxu0 0.0
    %300 = vmatpush1.msra.mxu0 0.0
    %301 = vmatprep.subr.mxu0 0.0
    %302 = vmatpush1.msra.mxu0 0.0
    %303 = vmatprep.subr.mxu0 0.0
    %304 = vmatpush1.msra.mxu0 0.0
    %305 = vmatprep.subr.mxu0 0.0
    %306 = vmatpush1.msra.mxu0 0.0
    %307 = vmatprep.subr.mxu0 0.0
    %308 = vmatpush1.msra.mxu0 0.0
    %309 = vmatprep.subr.mxu0 0.0
    %310 = vmatpush1.msra.mxu0 0.0
    %311 = vmatprep.subr.mxu0 0.0
    %312 = vmatpush1.msra.mxu0 0.0
    %313 = vmatprep.subr.mxu0 0.0
    %314 = vmatpush1.msra.mxu0 0.0
    %315 = vmatprep.subr.mxu0 0.0
    %316 = vmatpush1.msra.mxu0 0.0
    %317 = vmatprep.subr.mxu0 0.0
    %318 = vmatpush1.msra.mxu0 0.0
    %319 = vmatprep.subr.mxu0 0.0
    %320 = vmatpush1.msra.mxu0 0.0
    %321 = vmatprep.subr.mxu0 0.0
    %322 = vmatpush1.msra.mxu0 0.0
    %323 = vmatprep.subr.mxu0 0.0
    %324 = vmatpush1.msra.mxu0 0.0
    %325 = vmatprep.mubr.f32.mxu0 0.0
    %326 = vmatmul.mubr.f32.gmra.mrb[0].mxu0 %v259
    %v327 = vpop.f32.mrb[0].mxu0
    %v328 = vadd.f32 0.0, %v327
    %v329 = vpop.f32.mrb[0].mxu0
    %330 = vdwg.mxu0
    %v332 = vsel %vm104, %v251, 0
    %334 = vmatprep.subr.mxu0 0.0
    %335 = vmatpush1.msra.mxu0 %v328
    %336 = vmatprep.subr.mxu0 0.0
    %337 = vmatpush1.msra.mxu0 0.0
    %338 = vmatprep.subr.mxu0 0.0
    %339 = vmatpush1.msra.mxu0 0.0
    %340 = vmatprep.subr.mxu0 0.0
    %341 = vmatpush1.msra.mxu0 0.0
    %342 = vmatprep.subr.mxu0 0.0
    %343 = vmatpush1.msra.mxu0 0.0
    %344 = vmatprep.subr.mxu0 0.0
    %345 = vmatpush1.msra.mxu0 0.0
    %346 = vmatprep.subr.mxu0 0.0
    %347 = vmatpush1.msra.mxu0 0.0
    %348 = vmatprep.subr.mxu0 0.0
    %349 = vmatpush1.msra.mxu0 0.0
    %350 = vmatprep.subr.mxu0 0.0
    %351 = vmatpush1.msra.mxu0 0.0
    %352 = vmatprep.subr.mxu0 0.0
    %353 = vmatpush1.msra.mxu0 0.0
    %354 = vmatprep.subr.mxu0 0.0
    %355 = vmatpush1.msra.mxu0 0.0
    %356 = vmatprep.subr.mxu0 0.0
    %357 = vmatpush1.msra.mxu0 0.0
    %358 = vmatprep.subr.mxu0 0.0
    %359 = vmatpush1.msra.mxu0 0.0
    %360 = vmatprep.subr.mxu0 0.0
    %361 = vmatpush1.msra.mxu0 0.0
    %362 = vmatprep.subr.mxu0 0.0
    %363 = vmatpush1.msra.mxu0 0.0
    %364 = vmatprep.subr.mxu0 0.0
    %365 = vmatpush1.msra.mxu0 0.0
    %366 = vmatprep.subr.mxu0 0.0
    %367 = vmatpush1.msra.mxu0 0.0
    %368 = vmatprep.subr.mxu0 0.0
    %369 = vmatpush1.msra.mxu0 0.0
    %370 = vmatprep.subr.mxu0 0.0
    %371 = vmatpush1.msra.mxu0 0.0
    %372 = vmatprep.subr.mxu0 0.0
    %373 = vmatpush1.msra.mxu0 0.0
    %374 = vmatprep.subr.mxu0 0.0
    %375 = vmatpush1.msra.mxu0 0.0
    %376 = vmatprep.subr.mxu0 0.0
    %377 = vmatpush1.msra.mxu0 0.0
    %378 = vmatprep.subr.mxu0 0.0
    %379 = vmatpush1.msra.mxu0 0.0
    %380 = vmatprep.subr.mxu0 0.0
    %381 = vmatpush1.msra.mxu0 0.0
    %382 = vmatprep.subr.mxu0 0.0
    %383 = vmatpush1.msra.mxu0 0.0
    %384 = vmatprep.subr.mxu0 0.0
    %385 = vmatpush1.msra.mxu0 0.0
    %386 = vmatprep.subr.mxu0 0.0
    %387 = vmatpush1.msra.mxu0 0.0
    %388 = vmatprep.subr.mxu0 0.0
    %389 = vmatpush1.msra.mxu0 0.0
    %390 = vmatprep.subr.mxu0 0.0
    %391 = vmatpush1.msra.mxu0 0.0
    %392 = vmatprep.subr.mxu0 0.0
    %393 = vmatpush1.msra.mxu0 0.0
    %394 = vmatprep.subr.mxu0 0.0
    %395 = vmatpush1.msra.mxu0 0.0
    %396 = vmatprep.subr.mxu0 0.0
    %397 = vmatpush1.msra.mxu0 0.0
    %398 = vmatprep.mubr.f32.mxu0 0.0
    %399 = vmatmul.mubr.f32.gmra.mrb[0].mxu0 %v332
    %v400 = vpop.f32.mrb[0].mxu0
    %v401 = vadd.f32 0.0, %v400
    %v402 = vpop.f32.mrb[0].mxu0
    %403 = vdwg.mxu0
    %vm404 = vcmp.gt.f32.partialorder %v401, 0.0
    %v405 = vmul.f32 %v401, 0.2
    %v406 = vsel %vm404, %v401, %v405
    %v407 = vld [vmem:[%s4] sm:$0xff]
    %v408 = vld [vmem:[%s4 + $0x8] sm:$0xff]
    %v409 = vld [vmem:[%s4 + $0x10] sm:$0xff]
    %v410 = vld [vmem:[%s4 + $0x18] sm:$0xff]
    %v411 = vld [vmem:[%s4 + $0x20] sm:$0xff]
    %v412 = vld [vmem:[%s4 + $0x28] sm:$0xff]
    %v413 = vld [vmem:[%s4 + $0x30] sm:$0xff]
    %v414 = vld [vmem:[%s4 + $0x38] sm:$0xff]
    %vm415 = vcmask 523264
    %v417 = vsel %vm415, %v406, 0
    %419 = vmatprep.subr.mxu0 0.0
    %420 = vmatpush1.msra.mxu0 %v407
    %421 = vmatprep.subr.mxu0 0.0
    %422 = vmatpush1.msra.mxu0 %v408
    %423 = vmatprep.subr.mxu0 0.0
    %424 = vmatpush1.msra.mxu0 %v409
    %425 = vmatprep.subr.mxu0 0.0
    %426 = vmatpush1.msra.mxu0 %v410
    %427 = vmatprep.subr.mxu0 0.0
    %428 = vmatpush1.msra.mxu0 %v411
    %429 = vmatprep.subr.mxu0 0.0
    %430 = vmatpush1.msra.mxu0 %v412
    %431 = vmatprep.subr.mxu0 0.0
    %432 = vmatpush1.msra.mxu0 %v413
    %433 = vmatprep.subr.mxu0 0.0
    %434 = vmatpush1.msra.mxu0 %v414
    %435 = vmatprep.subr.mxu0 0.0
    %436 = vmatpush1.msra.mxu0 0.0
    %437 = vmatprep.subr.mxu0 0.0
    %438 = vmatpush1.msra.mxu0 0.0
    %439 = vmatprep.subr.mxu0 0.0
    %440 = vmatpush1.msra.mxu0 0.0
    %441 = vmatprep.subr.mxu0 0.0
    %442 = vmatpush1.msra.mxu0 0.0
    %443 = vmatprep.subr.mxu0 0.0
    %444 = vmatpush1.msra.mxu0 0.0
    %445 = vmatprep.subr.mxu0 0.0
    %446 = vmatpush1.msra.mxu0 0.0
    %447 = vmatprep.subr.mxu0 0.0
    %448 = vmatpush1.msra.mxu0 0.0
    %449 = vmatprep.subr.mxu0 0.0
    %450 = vmatpush1.msra.mxu0 0.0
    %451 = vmatprep.subr.mxu0 0.0
    %452 = vmatpush1.msra.mxu0 0.0
    %453 = vmatprep.subr.mxu0 0.0
    %454 = vmatpush1.msra.mxu0 0.0
    %455 = vmatprep.subr.mxu0 0.0
    %456 = vmatpush1.msra.mxu0 0.0
    %457 = vmatprep.subr.mxu0 0.0
    %458 = vmatpush1.msra.mxu0 0.0
    %459 = vmatprep.subr.mxu0 0.0
    %460 = vmatpush1.msra.mxu0 0.0
    %461 = vmatprep.subr.mxu0 0.0
    %462 = vmatpush1.msra.mxu0 0.0
    %463 = vmatprep.subr.mxu0 0.0
    %464 = vmatpush1.msra.mxu0 0.0
    %465 = vmatprep.subr.mxu0 0.0
    %466 = vmatpush1.msra.mxu0 0.0
    %467 = vmatprep.subr.mxu0 0.0
    %468 = vmatpush1.msra.mxu0 0.0
    %469 = vmatprep.subr.mxu0 0.0
    %470 = vmatpush1.msra.mxu0 0.0
    %471 = vmatprep.subr.mxu0 0.0
    %472 = vmatpush1.msra.mxu0 0.0
    %473 = vmatprep.subr.mxu0 0.0
    %474 = vmatpush1.msra.mxu0 0.0
    %475 = vmatprep.subr.mxu0 0.0
    %476 = vmatpush1.msra.mxu0 0.0
    %477 = vmatprep.subr.mxu0 0.0
    %478 = vmatpush1.msra.mxu0 0.0
    %479 = vmatprep.subr.mxu0 0.0
    %480 = vmatpush1.msra.mxu0 0.0
    %481 = vmatprep.subr.mxu0 0.0
    %482 = vmatpush1.msra.mxu0 0.0
    %483 = vmatprep.mubr.f32.mxu0 0.0
    %484 = vmatmul.mubr.f32.gmra.mrb[0].mxu0 %v417
    %v485 = vpop.f32.mrb[0].mxu0
    %v486 = vadd.f32 0.0, %v485
    %v487 = vpop.f32.mrb[0].mxu0
    %488 = vdwg.mxu0
    %489 = vmatprep.subr.mxu0 0.0
    %490 = vmatpush1.msra.mxu0 %v486
    %491 = vmatprep.subr.mxu0 0.0
    %492 = vmatpush1.msra.mxu0 0.0
    %493 = vmatprep.subr.mxu0 0.0
    %494 = vmatpush1.msra.mxu0 0.0
    %495 = vmatprep.subr.mxu0 0.0
    %496 = vmatpush1.msra.mxu0 0.0
    %497 = vmatprep.subr.mxu0 0.0
    %498 = vmatpush1.msra.mxu0 0.0
    %499 = vmatprep.subr.mxu0 0.0
    %500 = vmatpush1.msra.mxu0 0.0
    %501 = vmatprep.subr.mxu0 0.0
    %502 = vmatpush1.msra.mxu0 0.0
    %503 = vmatprep.subr.mxu0 0.0
    %504 = vmatpush1.msra.mxu0 0.0
    %505 = vmatprep.subr.mxu0 0.0
    %506 = vmatpush1.msra.mxu0 0.0
    %507 = vmatprep.subr.mxu0 0.0
    %508 = vmatpush1.msra.mxu0 0.0
    %509 = vmatprep.subr.mxu0 0.0
    %510 = vmatpush1.msra.mxu0 0.0
    %511 = vmatprep.subr.mxu0 0.0
    %512 = vmatpush1.msra.mxu0 0.0
    %513 = vmatprep.subr.mxu0 0.0
    %514 = vmatpush1.msra.mxu0 0.0
    %515 = vmatprep.subr.mxu0 0.0
    %516 = vmatpush1.msra.mxu0 0.0
    %517 = vmatprep.subr.mxu0 0.0
    %518 = vmatpush1.msra.mxu0 0.0
    %519 = vmatprep.subr.mxu0 0.0
    %520 = vmatpush1.msra.mxu0 0.0
    %521 = vmatprep.subr.mxu0 0.0
    %522 = vmatpush1.msra.mxu0 0.0
    %523 = vmatprep.subr.mxu0 0.0
    %524 = vmatpush1.msra.mxu0 0.0
    %525 = vmatprep.subr.mxu0 0.0
    %526 = vmatpush1.msra.mxu0 0.0
    %527 = vmatprep.subr.mxu0 0.0
    %528 = vmatpush1.msra.mxu0 0.0
    %529 = vmatprep.subr.mxu0 0.0
    %530 = vmatpush1.msra.mxu0 0.0
    %531 = vmatprep.subr.mxu0 0.0
    %532 = vmatpush1.msra.mxu0 0.0
    %533 = vmatprep.subr.mxu0 0.0
    %534 = vmatpush1.msra.mxu0 0.0
    %535 = vmatprep.subr.mxu0 0.0
    %536 = vmatpush1.msra.mxu0 0.0
    %537 = vmatprep.subr.mxu0 0.0
    %538 = vmatpush1.msra.mxu0 0.0
    %539 = vmatprep.subr.mxu0 0.0
    %540 = vmatpush1.msra.mxu0 0.0
    %541 = vmatprep.subr.mxu0 0.0
    %542 = vmatpush1.msra.mxu0 0.0
    %543 = vmatprep.subr.mxu0 0.0
    %544 = vmatpush1.msra.mxu0 0.0
    %545 = vmatprep.subr.mxu0 0.0
    %546 = vmatpush1.msra.mxu0 0.0
    %547 = vmatprep.subr.mxu0 0.0
    %548 = vmatpush1.msra.mxu0 0.0
    %549 = vmatprep.subr.mxu0 0.0
    %550 = vmatpush1.msra.mxu0 0.0
    %551 = vmatprep.subr.mxu0 0.0
    %552 = vmatpush1.msra.mxu0 0.0
    %553 = vmatprep.mubr.f32.mxu0 0.0
    %554 = vmatmul.mubr.f32.gmra.mrb[0].mxu0 %v332
    %v555 = vpop.f32.mrb[0].mxu0
    %v556 = vadd.f32 0.0, %v555
    %v557 = vpop.f32.mrb[0].mxu0
    %558 = vdwg.mxu0
    %v559 = vld [vmem:[%s6] sm:$0xf]
    %v560 = vld [vmem:[%s7] sm:$0x1]
    %v561 = vld [vmem:[%s5] sm:$0xff]
    %v562 = vld [vmem:[%s5 + $0x8] sm:$0xff]
    %v563 = vld [vmem:[%s5 + $0x10] sm:$0xff]
    %v564 = vld [vmem:[%s5 + $0x18] sm:$0xff]
    %v565 = vld [vmem:[%s5 + $0x20] sm:$0xff]
    %v566 = vld [vmem:[%s5 + $0x28] sm:$0xff]
    %v567 = vld [vmem:[%s5 + $0x30] sm:$0xff]
    %v568 = vld [vmem:[%s5 + $0x38] sm:$0xff]
    %v569 = vld [vmem:[%s5 + $0x40] sm:$0xff]
    %v570 = vld [vmem:[%s5 + $0x48] sm:$0xff]
    %v571 = vld [vmem:[%s5 + $0x50] sm:$0xff]
    %v572 = vld [vmem:[%s5 + $0x58] sm:$0xff]
    %v573 = vld [vmem:[%s5 + $0x60] sm:$0xff]
    %v574 = vld [vmem:[%s5 + $0x68] sm:$0xff]
    %v575 = vld [vmem:[%s5 + $0x70] sm:$0xff]
    %v576 = vld [vmem:[%s5 + $0x78] sm:$0xff]
    %v577 = vld [vmem:[%s5 + $0x80] sm:$0xff]
    %v578 = vld [vmem:[%s5 + $0x88] sm:$0xff]
    %v579 = vld [vmem:[%s5 + $0x90] sm:$0xff]
    %v580 = vld [vmem:[%s5 + $0x98] sm:$0xff]
    %v581 = vld [vmem:[%s5 + $0xa0] sm:$0xff]
    %v582 = vld [vmem:[%s5 + $0xa8] sm:$0xff]
    %v583 = vld [vmem:[%s5 + $0xb0] sm:$0xff]
    %v584 = vld [vmem:[%s5 + $0xb8] sm:$0xff]
    %v585 = vld [vmem:[%s5 + $0xc0] sm:$0xf]
    %587 = vset.pattern.permute.xlu0 0
    %588 = vperm.xlu0 %587, %v561
    %v589 = vpop.permute.xlu0 %588
    %592 = vset.pattern.permute.xlu0 0
    %593 = vperm.xlu0 %592, %v562
    %v594 = vpop.permute.xlu0 %593
    %597 = vset.pattern.permute.xlu0 0
    %598 = vperm.xlu0 %597, %v563
    %v599 = vpop.permute.xlu0 %598
    %602 = vset.pattern.permute.xlu0 0
    %603 = vperm.xlu0 %602, %v564
    %v604 = vpop.permute.xlu0 %603
    %607 = vset.pattern.permute.xlu0 0
    %608 = vperm.xlu0 %607, %v565
    %v609 = vpop.permute.xlu0 %608
    %612 = vset.pattern.permute.xlu0 0
    %613 = vperm.xlu0 %612, %v566
    %v614 = vpop.permute.xlu0 %613
    %617 = vset.pattern.permute.xlu0 0
    %618 = vperm.xlu0 %617, %v567
    %v619 = vpop.permute.xlu0 %618
    %622 = vset.pattern.permute.xlu0 0
    %623 = vperm.xlu0 %622, %v568
    %v624 = vpop.permute.xlu0 %623
    %627 = vset.pattern.permute.xlu0 0
    %628 = vperm.xlu0 %627, %v569
    %v629 = vpop.permute.xlu0 %628
    %632 = vset.pattern.permute.xlu0 0
    %633 = vperm.xlu0 %632, %v570
    %v634 = vpop.permute.xlu0 %633
    %637 = vset.pattern.permute.xlu0 0
    %638 = vperm.xlu0 %637, %v571
    %v639 = vpop.permute.xlu0 %638
    %642 = vset.pattern.permute.xlu0 0
    %643 = vperm.xlu0 %642, %v572
    %v644 = vpop.permute.xlu0 %643
    %647 = vset.pattern.permute.xlu0 0
    %648 = vperm.xlu0 %647, %v573
    %v649 = vpop.permute.xlu0 %648
    %652 = vset.pattern.permute.xlu0 0
    %653 = vperm.xlu0 %652, %v574
    %v654 = vpop.permute.xlu0 %653
    %657 = vset.pattern.permute.xlu0 0
    %658 = vperm.xlu0 %657, %v575
    %v659 = vpop.permute.xlu0 %658
    %662 = vset.pattern.permute.xlu0 0
    %663 = vperm.xlu0 %662, %v576
    %v664 = vpop.permute.xlu0 %663
    %667 = vset.pattern.permute.xlu0 0
    %668 = vperm.xlu0 %667, %v577
    %v669 = vpop.permute.xlu0 %668
    %672 = vset.pattern.permute.xlu0 0
    %673 = vperm.xlu0 %672, %v578
    %v674 = vpop.permute.xlu0 %673
    %677 = vset.pattern.permute.xlu0 0
    %678 = vperm.xlu0 %677, %v579
    %v679 = vpop.permute.xlu0 %678
    %682 = vset.pattern.permute.xlu0 0
    %683 = vperm.xlu0 %682, %v580
    %v684 = vpop.permute.xlu0 %683
    %687 = vset.pattern.permute.xlu0 0
    %688 = vperm.xlu0 %687, %v581
    %v689 = vpop.permute.xlu0 %688
    %692 = vset.pattern.permute.xlu0 0
    %693 = vperm.xlu0 %692, %v582
    %v694 = vpop.permute.xlu0 %693
    %697 = vset.pattern.permute.xlu0 0
    %698 = vperm.xlu0 %697, %v583
    %v699 = vpop.permute.xlu0 %698
    %702 = vset.pattern.permute.xlu0 0
    %703 = vperm.xlu0 %702, %v584
    %v704 = vpop.permute.xlu0 %703
    %707 = vset.pattern.permute.xlu0 0
    %708 = vperm.xlu0 %707, %v585
    %v709 = vpop.permute.xlu0 %708
    %v711 = vlaneseq
    %v712 = vshrl.u32 %v711, 7
    %v713 = vsub.s32 0, %v712
    %v714 = vrot.slane %v559, %v713
    %v715 = vmul.f32 %v589, %v714
    %v716 = vmul.f32 %v594, %v714
    %v717 = vmul.f32 %v599, %v714
    %v718 = vmul.f32 %v604, %v714
    %v719 = vmul.f32 %v609, %v714
    %v720 = vmul.f32 %v614, %v714
    %v721 = vmul.f32 %v619, %v714
    %v722 = vmul.f32 %v624, %v714
    %v723 = vmul.f32 %v629, %v714
    %v724 = vmul.f32 %v634, %v714
    %v725 = vmul.f32 %v639, %v714
    %v726 = vmul.f32 %v644, %v714
    %v727 = vmul.f32 %v649, %v714
    %v728 = vmul.f32 %v654, %v714
    %v729 = vmul.f32 %v659, %v714
    %v730 = vmul.f32 %v664, %v714
    %v731 = vmul.f32 %v669, %v714
    %v732 = vmul.f32 %v674, %v714
    %v733 = vmul.f32 %v679, %v714
    %v734 = vmul.f32 %v684, %v714
    %v735 = vmul.f32 %v689, %v714
    %v736 = vmul.f32 %v694, %v714
    %v737 = vmul.f32 %v699, %v714
    %v738 = vmul.f32 %v704, %v714
    %v739 = vmul.f32 %v709, %v714
    %740 = vset.pattern.permute.xlu0 1
    %741 = vperm.xlu0 %740, %v561
    %v742 = vpop.permute.xlu0 %741
    %744 = vset.pattern.permute.xlu0 1
    %745 = vperm.xlu0 %744, %v562
    %v746 = vpop.permute.xlu0 %745
    %748 = vset.pattern.permute.xlu0 1
    %749 = vperm.xlu0 %748, %v563
    %v750 = vpop.permute.xlu0 %749
    %752 = vset.pattern.permute.xlu0 1
    %753 = vperm.xlu0 %752, %v564
    %v754 = vpop.permute.xlu0 %753
    %756 = vset.pattern.permute.xlu0 1
    %757 = vperm.xlu0 %756, %v565
    %v758 = vpop.permute.xlu0 %757
    %760 = vset.pattern.permute.xlu0 1
    %761 = vperm.xlu0 %760, %v566
    %v762 = vpop.permute.xlu0 %761
    %764 = vset.pattern.permute.xlu0 1
    %765 = vperm.xlu0 %764, %v567
    %v766 = vpop.permute.xlu0 %765
    %768 = vset.pattern.permute.xlu0 1
    %769 = vperm.xlu0 %768, %v568
    %v770 = vpop.permute.xlu0 %769
    %772 = vset.pattern.permute.xlu0 1
    %773 = vperm.xlu0 %772, %v569
    %v774 = vpop.permute.xlu0 %773
    %776 = vset.pattern.permute.xlu0 1
    %777 = vperm.xlu0 %776, %v570
    %v778 = vpop.permute.xlu0 %777
    %780 = vset.pattern.permute.xlu0 1
    %781 = vperm.xlu0 %780, %v571
    %v782 = vpop.permute.xlu0 %781
    %784 = vset.pattern.permute.xlu0 1
    %785 = vperm.xlu0 %784, %v572
    %v786 = vpop.permute.xlu0 %785
    %788 = vset.pattern.permute.xlu0 1
    %789 = vperm.xlu0 %788, %v573
    %v790 = vpop.permute.xlu0 %789
    %792 = vset.pattern.permute.xlu0 1
    %793 = vperm.xlu0 %792, %v574
    %v794 = vpop.permute.xlu0 %793
    %796 = vset.pattern.permute.xlu0 1
    %797 = vperm.xlu0 %796, %v575
    %v798 = vpop.permute.xlu0 %797
    %800 = vset.pattern.permute.xlu0 1
    %801 = vperm.xlu0 %800, %v576
    %v802 = vpop.permute.xlu0 %801
    %804 = vset.pattern.permute.xlu0 1
    %805 = vperm.xlu0 %804, %v577
    %v806 = vpop.permute.xlu0 %805
    %808 = vset.pattern.permute.xlu0 1
    %809 = vperm.xlu0 %808, %v578
    %v810 = vpop.permute.xlu0 %809
    %812 = vset.pattern.permute.xlu0 1
    %813 = vperm.xlu0 %812, %v579
    %v814 = vpop.permute.xlu0 %813
    %816 = vset.pattern.permute.xlu0 1
    %817 = vperm.xlu0 %816, %v580
    %v818 = vpop.permute.xlu0 %817
    %820 = vset.pattern.permute.xlu0 1
    %821 = vperm.xlu0 %820, %v581
    %v822 = vpop.permute.xlu0 %821
    %824 = vset.pattern.permute.xlu0 1
    %825 = vperm.xlu0 %824, %v582
    %v826 = vpop.permute.xlu0 %825
    %828 = vset.pattern.permute.xlu0 1
    %829 = vperm.xlu0 %828, %v583
    %v830 = vpop.permute.xlu0 %829
    %832 = vset.pattern.permute.xlu0 1
    %833 = vperm.xlu0 %832, %v584
    %v834 = vpop.permute.xlu0 %833
    %836 = vset.pattern.permute.xlu0 1
    %837 = vperm.xlu0 %836, %v585
    %v838 = vpop.permute.xlu0 %837
    %v840 = vlaneseq
    %v841 = vshrl.u32 %v840, 7
    %v842 = vsub.s32 1, %v841
    %v843 = vrot.slane %v559, %v842
    %v844 = vmul.f32 %v742, %v843
    %v845 = vmul.f32 %v746, %v843
    %v846 = vmul.f32 %v750, %v843
    %v847 = vmul.f32 %v754, %v843
    %v848 = vmul.f32 %v758, %v843
    %v849 = vmul.f32 %v762, %v843
    %v850 = vmul.f32 %v766, %v843
    %v851 = vmul.f32 %v770, %v843
    %v852 = vmul.f32 %v774, %v843
    %v853 = vmul.f32 %v778, %v843
    %v854 = vmul.f32 %v782, %v843
    %v855 = vmul.f32 %v786, %v843
    %v856 = vmul.f32 %v790, %v843
    %v857 = vmul.f32 %v794, %v843
    %v858 = vmul.f32 %v798, %v843
    %v859 = vmul.f32 %v802, %v843
    %v860 = vmul.f32 %v806, %v843
    %v861 = vmul.f32 %v810, %v843
    %v862 = vmul.f32 %v814, %v843
    %v863 = vmul.f32 %v818, %v843
    %v864 = vmul.f32 %v822, %v843
    %v865 = vmul.f32 %v826, %v843
    %v866 = vmul.f32 %v830, %v843
    %v867 = vmul.f32 %v834, %v843
    %v868 = vmul.f32 %v838, %v843
    %v869 = vadd.f32 %v715, %v844
    %v870 = vadd.f32 %v716, %v845
    %v871 = vadd.f32 %v717, %v846
    %v872 = vadd.f32 %v718, %v847
    %v873 = vadd.f32 %v719, %v848
    %v874 = vadd.f32 %v720, %v849
    %v875 = vadd.f32 %v721, %v850
    %v876 = vadd.f32 %v722, %v851
    %v877 = vadd.f32 %v723, %v852
    %v878 = vadd.f32 %v724, %v853
    %v879 = vadd.f32 %v725, %v854
    %v880 = vadd.f32 %v726, %v855
    %v881 = vadd.f32 %v727, %v856
    %v882 = vadd.f32 %v728, %v857
    %v883 = vadd.f32 %v729, %v858
    %v884 = vadd.f32 %v730, %v859
    %v885 = vadd.f32 %v731, %v860
    %v886 = vadd.f32 %v732, %v861
    %v887 = vadd.f32 %v733, %v862
    %v888 = vadd.f32 %v734, %v863
    %v889 = vadd.f32 %v735, %v864
    %v890 = vadd.f32 %v736, %v865
    %v891 = vadd.f32 %v737, %v866
    %v892 = vadd.f32 %v738, %v867
    %v893 = vadd.f32 %v739, %v868
    %894 = vset.pattern.permute.xlu0 2
    %895 = vperm.xlu0 %894, %v561
    %v896 = vpop.permute.xlu0 %895
    %898 = vset.pattern.permute.xlu0 2
    %899 = vperm.xlu0 %898, %v562
    %v900 = vpop.permute.xlu0 %899
    %902 = vset.pattern.permute.xlu0 2
    %903 = vperm.xlu0 %902, %v563
    %v904 = vpop.permute.xlu0 %903
    %906 = vset.pattern.permute.xlu0 2
    %907 = vperm.xlu0 %906, %v564
    %v908 = vpop.permute.xlu0 %907
    %910 = vset.pattern.permute.xlu0 2
    %911 = vperm.xlu0 %910, %v565
    %v912 = vpop.permute.xlu0 %911
    %914 = vset.pattern.permute.xlu0 2
    %915 = vperm.xlu0 %914, %v566
    %v916 = vpop.permute.xlu0 %915
    %918 = vset.pattern.permute.xlu0 2
    %919 = vperm.xlu0 %918, %v567
    %v920 = vpop.permute.xlu0 %919
    %922 = vset.pattern.permute.xlu0 2
    %923 = vperm.xlu0 %922, %v568
    %v924 = vpop.permute.xlu0 %923
    %926 = vset.pattern.permute.xlu0 2
    %927 = vperm.xlu0 %926, %v569
    %v928 = vpop.permute.xlu0 %927
    %930 = vset.pattern.permute.xlu0 2
    %931 = vperm.xlu0 %930, %v570
    %v932 = vpop.permute.xlu0 %931
    %934 = vset.pattern.permute.xlu0 2
    %935 = vperm.xlu0 %934, %v571
    %v936 = vpop.permute.xlu0 %935
    %938 = vset.pattern.permute.xlu0 2
    %939 = vperm.xlu0 %938, %v572
    %v940 = vpop.permute.xlu0 %939
    %942 = vset.pattern.permute.xlu0 2
    %943 = vperm.xlu0 %942, %v573
    %v944 = vpop.permute.xlu0 %943
    %946 = vset.pattern.permute.xlu0 2
    %947 = vperm.xlu0 %946, %v574
    %v948 = vpop.permute.xlu0 %947
    %950 = vset.pattern.permute.xlu0 2
    %951 = vperm.xlu0 %950, %v575
    %v952 = vpop.permute.xlu0 %951
    %954 = vset.pattern.permute.xlu0 2
    %955 = vperm.xlu0 %954, %v576
    %v956 = vpop.permute.xlu0 %955
    %958 = vset.pattern.permute.xlu0 2
    %959 = vperm.xlu0 %958, %v577
    %v960 = vpop.permute.xlu0 %959
    %962 = vset.pattern.permute.xlu0 2
    %963 = vperm.xlu0 %962, %v578
    %v964 = vpop.permute.xlu0 %963
    %966 = vset.pattern.permute.xlu0 2
    %967 = vperm.xlu0 %966, %v579
    %v968 = vpop.permute.xlu0 %967
    %970 = vset.pattern.permute.xlu0 2
    %971 = vperm.xlu0 %970, %v580
    %v972 = vpop.permute.xlu0 %971
    %974 = vset.pattern.permute.xlu0 2
    %975 = vperm.xlu0 %974, %v581
    %v976 = vpop.permute.xlu0 %975
    %978 = vset.pattern.permute.xlu0 2
    %979 = vperm.xlu0 %978, %v582
    %v980 = vpop.permute.xlu0 %979
    %982 = vset.pattern.permute.xlu0 2
    %983 = vperm.xlu0 %982, %v583
    %v984 = vpop.permute.xlu0 %983
    %986 = vset.pattern.permute.xlu0 2
    %987 = vperm.xlu0 %986, %v584
    %v988 = vpop.permute.xlu0 %987
    %990 = vset.pattern.permute.xlu0 2
    %991 = vperm.xlu0 %990, %v585
    %v992 = vpop.permute.xlu0 %991
    %v994 = vlaneseq
    %v995 = vshrl.u32 %v994, 7
    %v996 = vsub.s32 2, %v995
    %v997 = vrot.slane %v559, %v996
    %v998 = vmul.f32 %v896, %v997
    %v999 = vmul.f32 %v900, %v997
    %v1000 = vmul.f32 %v904, %v997
    %v1001 = vmul.f32 %v908, %v997
    %v1002 = vmul.f32 %v912, %v997
    %v1003 = vmul.f32 %v916, %v997
    %v1004 = vmul.f32 %v920, %v997
    %v1005 = vmul.f32 %v924, %v997
    %v1006 = vmul.f32 %v928, %v997
    %v1007 = vmul.f32 %v932, %v997
    %v1008 = vmul.f32 %v936, %v997
    %v1009 = vmul.f32 %v940, %v997
    %v1010 = vmul.f32 %v944, %v997
    %v1011 = vmul.f32 %v948, %v997
    %v1012 = vmul.f32 %v952, %v997
    %v1013 = vmul.f32 %v956, %v997
    %v1014 = vmul.f32 %v960, %v997
    %v1015 = vmul.f32 %v964, %v997
    %v1016 = vmul.f32 %v968, %v997
    %v1017 = vmul.f32 %v972, %v997
    %v1018 = vmul.f32 %v976, %v997
    %v1019 = vmul.f32 %v980, %v997
    %v1020 = vmul.f32 %v984, %v997
    %v1021 = vmul.f32 %v988, %v997
    %v1022 = vmul.f32 %v992, %v997
    %v1023 = vadd.f32 %v869, %v998
    %v1024 = vadd.f32 %v870, %v999
    %v1025 = vadd.f32 %v871, %v1000
    %v1026 = vadd.f32 %v872, %v1001
    %v1027 = vadd.f32 %v873, %v1002
    %v1028 = vadd.f32 %v874, %v1003
    %v1029 = vadd.f32 %v875, %v1004
    %v1030 = vadd.f32 %v876, %v1005
    %v1031 = vadd.f32 %v877, %v1006
    %v1032 = vadd.f32 %v878, %v1007
    %v1033 = vadd.f32 %v879, %v1008
    %v1034 = vadd.f32 %v880, %v1009
    %v1035 = vadd.f32 %v881, %v1010
    %v1036 = vadd.f32 %v882, %v1011
    %v1037 = vadd.f32 %v883, %v1012
    %v1038 = vadd.f32 %v884, %v1013
    %v1039 = vadd.f32 %v885, %v1014
    %v1040 = vadd.f32 %v886, %v1015
    %v1041 = vadd.f32 %v887, %v1016
    %v1042 = vadd.f32 %v888, %v1017
    %v1043 = vadd.f32 %v889, %v1018
    %v1044 = vadd.f32 %v890, %v1019
    %v1045 = vadd.f32 %v891, %v1020
    %v1046 = vadd.f32 %v892, %v1021
    %v1047 = vadd.f32 %v893, %v1022
    %1048 = vset.pattern.permute.xlu0 3
    %1049 = vperm.xlu0 %1048, %v561
    %v1050 = vpop.permute.xlu0 %1049
    %1052 = vset.pattern.permute.xlu0 3
    %1053 = vperm.xlu0 %1052, %v562
    %v1054 = vpop.permute.xlu0 %1053
    %1056 = vset.pattern.permute.xlu0 3
    %1057 = vperm.xlu0 %1056, %v563
    %v1058 = vpop.permute.xlu0 %1057
    %1060 = vset.pattern.permute.xlu0 3
    %1061 = vperm.xlu0 %1060, %v564
    %v1062 = vpop.permute.xlu0 %1061
    %1064 = vset.pattern.permute.xlu0 3
    %1065 = vperm.xlu0 %1064, %v565
    %v1066 = vpop.permute.xlu0 %1065
    %1068 = vset.pattern.permute.xlu0 3
    %1069 = vperm.xlu0 %1068, %v566
    %v1070 = vpop.permute.xlu0 %1069
    %1072 = vset.pattern.permute.xlu0 3
    %1073 = vperm.xlu0 %1072, %v567
    %v1074 = vpop.permute.xlu0 %1073
    %1076 = vset.pattern.permute.xlu0 3
    %1077 = vperm.xlu0 %1076, %v568
    %v1078 = vpop.permute.xlu0 %1077
    %1080 = vset.pattern.permute.xlu0 3
    %1081 = vperm.xlu0 %1080, %v569
    %v1082 = vpop.permute.xlu0 %1081
    %1084 = vset.pattern.permute.xlu0 3
    %1085 = vperm.xlu0 %1084, %v570
    %v1086 = vpop.permute.xlu0 %1085
    %1088 = vset.pattern.permute.xlu0 3
    %1089 = vperm.xlu0 %1088, %v571
    %v1090 = vpop.permute.xlu0 %1089
    %1092 = vset.pattern.permute.xlu0 3
    %1093 = vperm.xlu0 %1092, %v572
    %v1094 = vpop.permute.xlu0 %1093
    %1096 = vset.pattern.permute.xlu0 3
    %1097 = vperm.xlu0 %1096, %v573
    %v1098 = vpop.permute.xlu0 %1097
    %1100 = vset.pattern.permute.xlu0 3
    %1101 = vperm.xlu0 %1100, %v574
    %v1102 = vpop.permute.xlu0 %1101
    %1104 = vset.pattern.permute.xlu0 3
    %1105 = vperm.xlu0 %1104, %v575
    %v1106 = vpop.permute.xlu0 %1105
    %1108 = vset.pattern.permute.xlu0 3
    %1109 = vperm.xlu0 %1108, %v576
    %v1110 = vpop.permute.xlu0 %1109
    %1112 = vset.pattern.permute.xlu0 3
    %1113 = vperm.xlu0 %1112, %v577
    %v1114 = vpop.permute.xlu0 %1113
    %1116 = vset.pattern.permute.xlu0 3
    %1117 = vperm.xlu0 %1116, %v578
    %v1118 = vpop.permute.xlu0 %1117
    %1120 = vset.pattern.permute.xlu0 3
    %1121 = vperm.xlu0 %1120, %v579
    %v1122 = vpop.permute.xlu0 %1121
    %1124 = vset.pattern.permute.xlu0 3
    %1125 = vperm.xlu0 %1124, %v580
    %v1126 = vpop.permute.xlu0 %1125
    %1128 = vset.pattern.permute.xlu0 3
    %1129 = vperm.xlu0 %1128, %v581
    %v1130 = vpop.permute.xlu0 %1129
    %1132 = vset.pattern.permute.xlu0 3
    %1133 = vperm.xlu0 %1132, %v582
    %v1134 = vpop.permute.xlu0 %1133
    %1136 = vset.pattern.permute.xlu0 3
    %1137 = vperm.xlu0 %1136, %v583
    %v1138 = vpop.permute.xlu0 %1137
    %1140 = vset.pattern.permute.xlu0 3
    %1141 = vperm.xlu0 %1140, %v584
    %v1142 = vpop.permute.xlu0 %1141
    %1144 = vset.pattern.permute.xlu0 3
    %1145 = vperm.xlu0 %1144, %v585
    %v1146 = vpop.permute.xlu0 %1145
    %v1148 = vlaneseq
    %v1149 = vshrl.u32 %v1148, 7
    %v1150 = vsub.s32 3, %v1149
    %v1151 = vrot.slane %v559, %v1150
    %v1152 = vmul.f32 %v1050, %v1151
    %v1153 = vmul.f32 %v1054, %v1151
    %v1154 = vmul.f32 %v1058, %v1151
    %v1155 = vmul.f32 %v1062, %v1151
    %v1156 = vmul.f32 %v1066, %v1151
    %v1157 = vmul.f32 %v1070, %v1151
    %v1158 = vmul.f32 %v1074, %v1151
    %v1159 = vmul.f32 %v1078, %v1151
    %v1160 = vmul.f32 %v1082, %v1151
    %v1161 = vmul.f32 %v1086, %v1151
    %v1162 = vmul.f32 %v1090, %v1151
    %v1163 = vmul.f32 %v1094, %v1151
    %v1164 = vmul.f32 %v1098, %v1151
    %v1165 = vmul.f32 %v1102, %v1151
    %v1166 = vmul.f32 %v1106, %v1151
    %v1167 = vmul.f32 %v1110, %v1151
    %v1168 = vmul.f32 %v1114, %v1151
    %v1169 = vmul.f32 %v1118, %v1151
    %v1170 = vmul.f32 %v1122, %v1151
    %v1171 = vmul.f32 %v1126, %v1151
    %v1172 = vmul.f32 %v1130, %v1151
    %v1173 = vmul.f32 %v1134, %v1151
    %v1174 = vmul.f32 %v1138, %v1151
    %v1175 = vmul.f32 %v1142, %v1151
    %v1176 = vmul.f32 %v1146, %v1151
    %v1177 = vadd.f32 %v1023, %v1152
    %v1178 = vadd.f32 %v1024, %v1153
    %v1179 = vadd.f32 %v1025, %v1154
    %v1180 = vadd.f32 %v1026, %v1155
    %v1181 = vadd.f32 %v1027, %v1156
    %v1182 = vadd.f32 %v1028, %v1157
    %v1183 = vadd.f32 %v1029, %v1158
    %v1184 = vadd.f32 %v1030, %v1159
    %v1185 = vadd.f32 %v1031, %v1160
    %v1186 = vadd.f32 %v1032, %v1161
    %v1187 = vadd.f32 %v1033, %v1162
    %v1188 = vadd.f32 %v1034, %v1163
    %v1189 = vadd.f32 %v1035, %v1164
    %v1190 = vadd.f32 %v1036, %v1165
    %v1191 = vadd.f32 %v1037, %v1166
    %v1192 = vadd.f32 %v1038, %v1167
    %v1193 = vadd.f32 %v1039, %v1168
    %v1194 = vadd.f32 %v1040, %v1169
    %v1195 = vadd.f32 %v1041, %v1170
    %v1196 = vadd.f32 %v1042, %v1171
    %v1197 = vadd.f32 %v1043, %v1172
    %v1198 = vadd.f32 %v1044, %v1173
    %v1199 = vadd.f32 %v1045, %v1174
    %v1200 = vadd.f32 %v1046, %v1175
    %v1201 = vadd.f32 %v1047, %v1176
    %v1203 = vlaneseq
    %v1204 = vshrl.u32 %v1203, 7
    %v1205 = vsub.s32 0, %v1204
    %v1206 = vrot.slane %v560, %v1205
    %v1208 = vadd.f32 %v1177, %v1206
    %v1209 = vadd.f32 %v1178, %v1206
    %v1210 = vadd.f32 %v1179, %v1206
    %v1211 = vadd.f32 %v1180, %v1206
    %v1212 = vadd.f32 %v1181, %v1206
    %v1213 = vadd.f32 %v1182, %v1206
    %v1214 = vadd.f32 %v1183, %v1206
    %v1215 = vadd.f32 %v1184, %v1206
    %v1216 = vadd.f32 %v1185, %v1206
    %v1217 = vadd.f32 %v1186, %v1206
    %v1218 = vadd.f32 %v1187, %v1206
    %v1219 = vadd.f32 %v1188, %v1206
    %v1220 = vadd.f32 %v1189, %v1206
    %v1221 = vadd.f32 %v1190, %v1206
    %v1222 = vadd.f32 %v1191, %v1206
    %v1223 = vadd.f32 %v1192, %v1206
    %v1224 = vadd.f32 %v1193, %v1206
    %v1225 = vadd.f32 %v1194, %v1206
    %v1226 = vadd.f32 %v1195, %v1206
    %v1227 = vadd.f32 %v1196, %v1206
    %v1228 = vadd.f32 %v1197, %v1206
    %v1229 = vadd.f32 %v1198, %v1206
    %v1230 = vadd.f32 %v1199, %v1206
    %v1231 = vadd.f32 %v1200, %v1206
    %v1232 = vadd.f32 %v1201, %v1206
    %v1233 = vmax.f32 %v1208, 0.0
    %v1234 = vmax.f32 %v1209, 0.0
    %v1235 = vmax.f32 %v1210, 0.0
    %v1236 = vmax.f32 %v1211, 0.0
    %v1237 = vmax.f32 %v1212, 0.0
    %v1238 = vmax.f32 %v1213, 0.0
    %v1239 = vmax.f32 %v1214, 0.0
    %v1240 = vmax.f32 %v1215, 0.0
    %v1241 = vmax.f32 %v1216, 0.0
    %v1242 = vmax.f32 %v1217, 0.0
    %v1243 = vmax.f32 %v1218, 0.0
    %v1244 = vmax.f32 %v1219, 0.0
    %v1245 = vmax.f32 %v1220, 0.0
    %v1246 = vmax.f32 %v1221, 0.0
    %v1247 = vmax.f32 %v1222, 0.0
    %v1248 = vmax.f32 %v1223, 0.0
    %v1249 = vmax.f32 %v1224, 0.0
    %v1250 = vmax.f32 %v1225, 0.0
    %v1251 = vmax.f32 %v1226, 0.0
    %v1252 = vmax.f32 %v1227, 0.0
    %v1253 = vmax.f32 %v1228, 0.0
    %v1254 = vmax.f32 %v1229, 0.0
    %v1255 = vmax.f32 %v1230, 0.0
    %v1256 = vmax.f32 %v1231, 0.0
    %v1257 = vmax.f32 %v1232, 0.0
    %v1258 = vmax.f32 %v1233, %v1237
    %v1259 = vmax.f32 %v1234, %v1238
    %v1260 = vmax.f32 %v1235, %v1239
    %v1261 = vmax.f32 %v1236, %v1240
    %v1262 = vmax.f32 %v1258, %v1241
    %v1263 = vmax.f32 %v1259, %v1242
    %v1264 = vmax.f32 %v1260, %v1243
    %v1265 = vmax.f32 %v1261, %v1244
    %v1266 = vmax.f32 %v1262, %v1245
    %v1267 = vmax.f32 %v1263, %v1246
    %v1268 = vmax.f32 %v1264, %v1247
    %v1269 = vmax.f32 %v1265, %v1248
    %v1270 = vmax.f32 %v1266, %v1249
    %v1271 = vmax.f32 %v1267, %v1250
    %v1272 = vmax.f32 %v1268, %v1251
    %v1273 = vmax.f32 %v1269, %v1252
    %v1274 = vmax.f32 %v1270, %v1253
    %v1275 = vmax.f32 %v1271, %v1254
    %v1276 = vmax.f32 %v1272, %v1255
    %v1277 = vmax.f32 %v1273, %v1256
    %vm1278 = vcmask 1043456
    %v1279 = vsel %vm1278, %v1257, -inf
    %v1280 = vmax.f32 %v1274, %v1279
    %v1281 = vmax.f32 %v1280, %v1275
    %v1282 = vmax.f32 %v1276, %v1277
    %v1283 = vmax.f32 %v1281, %v1282
    %v1284 = vrot.slane %v1283, 4
    %v1285 = vmax.f32 %v1283, %v1284
    %v1286 = vrot.slane %v1285, 2
    %v1287 = vmax.f32 %v1285, %v1286
    %v1288 = vrot.slane %v1287, 1
    %v1289 = vmax.f32 %v1287, %v1288
    %1290 = vst [vmem:[#allocation2] sm:$0x1] %v1289
    %s1291 = scalar_lea.vmem %s5, 200
    %v1292 = vld [vmem:[%s1291] sm:$0xff]
    %v1293 = vld [vmem:[%s1291 + $0x8] sm:$0xff]
    %v1294 = vld [vmem:[%s1291 + $0x10] sm:$0xff]
    %v1295 = vld [vmem:[%s1291 + $0x18] sm:$0xff]
    %v1296 = vld [vmem:[%s1291 + $0x20] sm:$0xff]
    %v1297 = vld [vmem:[%s1291 + $0x28] sm:$0xff]
    %v1298 = vld [vmem:[%s1291 + $0x30] sm:$0xff]
    %v1299 = vld [vmem:[%s1291 + $0x38] sm:$0xff]
    %v1300 = vld [vmem:[%s1291 + $0x40] sm:$0xff]
    %v1301 = vld [vmem:[%s1291 + $0x48] sm:$0xff]
    %v1302 = vld [vmem:[%s1291 + $0x50] sm:$0xff]
    %v1303 = vld [vmem:[%s1291 + $0x58] sm:$0xff]
    %v1304 = vld [vmem:[%s1291 + $0x60] sm:$0xff]
    %v1305 = vld [vmem:[%s1291 + $0x68] sm:$0xff]
    %v1306 = vld [vmem:[%s1291 + $0x70] sm:$0xff]
    %v1307 = vld [vmem:[%s1291 + $0x78] sm:$0xff]
    %v1308 = vld [vmem:[%s1291 + $0x80] sm:$0xff]
    %v1309 = vld [vmem:[%s1291 + $0x88] sm:$0xff]
    %v1310 = vld [vmem:[%s1291 + $0x90] sm:$0xff]
    %v1311 = vld [vmem:[%s1291 + $0x98] sm:$0xff]
    %v1312 = vld [vmem:[%s1291 + $0xa0] sm:$0xff]
    %v1313 = vld [vmem:[%s1291 + $0xa8] sm:$0xff]
    %v1314 = vld [vmem:[%s1291 + $0xb0] sm:$0xff]
    %v1315 = vld [vmem:[%s1291 + $0xb8] sm:$0xff]
    %v1316 = vld [vmem:[%s1291 + $0xc0] sm:$0xf]
    %1318 = vset.pattern.permute.xlu0 0
    %1319 = vperm.xlu0 %1318, %v1292
    %v1320 = vpop.permute.xlu0 %1319
    %1323 = vset.pattern.permute.xlu0 0
    %1324 = vperm.xlu0 %1323, %v1293
    %v1325 = vpop.permute.xlu0 %1324
    %1328 = vset.pattern.permute.xlu0 0
    %1329 = vperm.xlu0 %1328, %v1294
    %v1330 = vpop.permute.xlu0 %1329
    %1333 = vset.pattern.permute.xlu0 0
    %1334 = vperm.xlu0 %1333, %v1295
    %v1335 = vpop.permute.xlu0 %1334
    %1338 = vset.pattern.permute.xlu0 0
    %1339 = vperm.xlu0 %1338, %v1296
    %v1340 = vpop.permute.xlu0 %1339
    %1343 = vset.pattern.permute.xlu0 0
    %1344 = vperm.xlu0 %1343, %v1297
    %v1345 = vpop.permute.xlu0 %1344
    %1348 = vset.pattern.permute.xlu0 0
    %1349 = vperm.xlu0 %1348, %v1298
    %v1350 = vpop.permute.xlu0 %1349
    %1353 = vset.pattern.permute.xlu0 0
    %1354 = vperm.xlu0 %1353, %v1299
    %v1355 = vpop.permute.xlu0 %1354
    %1358 = vset.pattern.permute.xlu0 0
    %1359 = vperm.xlu0 %1358, %v1300
    %v1360 = vpop.permute.xlu0 %1359
    %1363 = vset.pattern.permute.xlu0 0
    %1364 = vperm.xlu0 %1363, %v1301
    %v1365 = vpop.permute.xlu0 %1364
    %1368 = vset.pattern.permute.xlu0 0
    %1369 = vperm.xlu0 %1368, %v1302
    %v1370 = vpop.permute.xlu0 %1369
    %1373 = vset.pattern.permute.xlu0 0
    %1374 = vperm.xlu0 %1373, %v1303
    %v1375 = vpop.permute.xlu0 %1374
    %1378 = vset.pattern.permute.xlu0 0
    %1379 = vperm.xlu0 %1378, %v1304
    %v1380 = vpop.permute.xlu0 %1379
    %1383 = vset.pattern.permute.xlu0 0
    %1384 = vperm.xlu0 %1383, %v1305
    %v1385 = vpop.permute.xlu0 %1384
    %1388 = vset.pattern.permute.xlu0 0
    %1389 = vperm.xlu0 %1388, %v1306
    %v1390 = vpop.permute.xlu0 %1389
    %1393 = vset.pattern.permute.xlu0 0
    %1394 = vperm.xlu0 %1393, %v1307
    %v1395 = vpop.permute.xlu0 %1394
    %1398 = vset.pattern.permute.xlu0 0
    %1399 = vperm.xlu0 %1398, %v1308
    %v1400 = vpop.permute.xlu0 %1399
    %1403 = vset.pattern.permute.xlu0 0
    %1404 = vperm.xlu0 %1403, %v1309
    %v1405 = vpop.permute.xlu0 %1404
    %1408 = vset.pattern.permute.xlu0 0
    %1409 = vperm.xlu0 %1408, %v1310
    %v1410 = vpop.permute.xlu0 %1409
    %1413 = vset.pattern.permute.xlu0 0
    %1414 = vperm.xlu0 %1413, %v1311
    %v1415 = vpop.permute.xlu0 %1414
    %1418 = vset.pattern.permute.xlu0 0
    %1419 = vperm.xlu0 %1418, %v1312
    %v1420 = vpop.permute.xlu0 %1419
    %1423 = vset.pattern.permute.xlu0 0
    %1424 = vperm.xlu0 %1423, %v1313
    %v1425 = vpop.permute.xlu0 %1424
    %1428 = vset.pattern.permute.xlu0 0
    %1429 = vperm.xlu0 %1428, %v1314
    %v1430 = vpop.permute.xlu0 %1429
    %1433 = vset.pattern.permute.xlu0 0
    %1434 = vperm.xlu0 %1433, %v1315
    %v1435 = vpop.permute.xlu0 %1434
    %1438 = vset.pattern.permute.xlu0 0
    %1439 = vperm.xlu0 %1438, %v1316
    %v1440 = vpop.permute.xlu0 %1439
    %v1442 = vmul.f32 %v1320, %v714
    %v1443 = vmul.f32 %v1325, %v714
    %v1444 = vmul.f32 %v1330, %v714
    %v1445 = vmul.f32 %v1335, %v714
    %v1446 = vmul.f32 %v1340, %v714
    %v1447 = vmul.f32 %v1345, %v714
    %v1448 = vmul.f32 %v1350, %v714
    %v1449 = vmul.f32 %v1355, %v714
    %v1450 = vmul.f32 %v1360, %v714
    %v1451 = vmul.f32 %v1365, %v714
    %v1452 = vmul.f32 %v1370, %v714
    %v1453 = vmul.f32 %v1375, %v714
    %v1454 = vmul.f32 %v1380, %v714
    %v1455 = vmul.f32 %v1385, %v714
    %v1456 = vmul.f32 %v1390, %v714
    %v1457 = vmul.f32 %v1395, %v714
    %v1458 = vmul.f32 %v1400, %v714
    %v1459 = vmul.f32 %v1405, %v714
    %v1460 = vmul.f32 %v1410, %v714
    %v1461 = vmul.f32 %v1415, %v714
    %v1462 = vmul.f32 %v1420, %v714
    %v1463 = vmul.f32 %v1425, %v714
    %v1464 = vmul.f32 %v1430, %v714
    %v1465 = vmul.f32 %v1435, %v714
    %v1466 = vmul.f32 %v1440, %v714
    %1467 = vset.pattern.permute.xlu0 1
    %1468 = vperm.xlu0 %1467, %v1292
    %v1469 = vpop.permute.xlu0 %1468
    %1471 = vset.pattern.permute.xlu0 1
    %1472 = vperm.xlu0 %1471, %v1293
    %v1473 = vpop.permute.xlu0 %1472
    %1475 = vset.pattern.permute.xlu0 1
    %1476 = vperm.xlu0 %1475, %v1294
    %v1477 = vpop.permute.xlu0 %1476
    %1479 = vset.pattern.permute.xlu0 1
    %1480 = vperm.xlu0 %1479, %v1295
    %v1481 = vpop.permute.xlu0 %1480
    %1483 = vset.pattern.permute.xlu0 1
    %1484 = vperm.xlu0 %1483, %v1296
    %v1485 = vpop.permute.xlu0 %1484
    %1487 = vset.pattern.permute.xlu0 1
    %1488 = vperm.xlu0 %1487, %v1297
    %v1489 = vpop.permute.xlu0 %1488
    %1491 = vset.pattern.permute.xlu0 1
    %1492 = vperm.xlu0 %1491, %v1298
    %v1493 = vpop.permute.xlu0 %1492
    %1495 = vset.pattern.permute.xlu0 1
    %1496 = vperm.xlu0 %1495, %v1299
    %v1497 = vpop.permute.xlu0 %1496
    %1499 = vset.pattern.permute.xlu0 1
    %1500 = vperm.xlu0 %1499, %v1300
    %v1501 = vpop.permute.xlu0 %1500
    %1503 = vset.pattern.permute.xlu0 1
    %1504 = vperm.xlu0 %1503, %v1301
    %v1505 = vpop.permute.xlu0 %1504
    %1507 = vset.pattern.permute.xlu0 1
    %1508 = vperm.xlu0 %1507, %v1302
    %v1509 = vpop.permute.xlu0 %1508
    %1511 = vset.pattern.permute.xlu0 1
    %1512 = vperm.xlu0 %1511, %v1303
    %v1513 = vpop.permute.xlu0 %1512
    %1515 = vset.pattern.permute.xlu0 1
    %1516 = vperm.xlu0 %1515, %v1304
    %v1517 = vpop.permute.xlu0 %1516
    %1519 = vset.pattern.permute.xlu0 1
    %1520 = vperm.xlu0 %1519, %v1305
    %v1521 = vpop.permute.xlu0 %1520
    %1523 = vset.pattern.permute.xlu0 1
    %1524 = vperm.xlu0 %1523, %v1306
    %v1525 = vpop.permute.xlu0 %1524
    %1527 = vset.pattern.permute.xlu0 1
    %1528 = vperm.xlu0 %1527, %v1307
    %v1529 = vpop.permute.xlu0 %1528
    %1531 = vset.pattern.permute.xlu0 1
    %1532 = vperm.xlu0 %1531, %v1308
    %v1533 = vpop.permute.xlu0 %1532
    %1535 = vset.pattern.permute.xlu0 1
    %1536 = vperm.xlu0 %1535, %v1309
    %v1537 = vpop.permute.xlu0 %1536
    %1539 = vset.pattern.permute.xlu0 1
    %1540 = vperm.xlu0 %1539, %v1310
    %v1541 = vpop.permute.xlu0 %1540
    %1543 = vset.pattern.permute.xlu0 1
    %1544 = vperm.xlu0 %1543, %v1311
    %v1545 = vpop.permute.xlu0 %1544
    %1547 = vset.pattern.permute.xlu0 1
    %1548 = vperm.xlu0 %1547, %v1312
    %v1549 = vpop.permute.xlu0 %1548
    %1551 = vset.pattern.permute.xlu0 1
    %1552 = vperm.xlu0 %1551, %v1313
    %v1553 = vpop.permute.xlu0 %1552
    %1555 = vset.pattern.permute.xlu0 1
    %1556 = vperm.xlu0 %1555, %v1314
    %v1557 = vpop.permute.xlu0 %1556
    %1559 = vset.pattern.permute.xlu0 1
    %1560 = vperm.xlu0 %1559, %v1315
    %v1561 = vpop.permute.xlu0 %1560
    %1563 = vset.pattern.permute.xlu0 1
    %1564 = vperm.xlu0 %1563, %v1316
    %v1565 = vpop.permute.xlu0 %1564
    %v1567 = vmul.f32 %v1469, %v843
    %v1568 = vmul.f32 %v1473, %v843
    %v1569 = vmul.f32 %v1477, %v843
    %v1570 = vmul.f32 %v1481, %v843
    %v1571 = vmul.f32 %v1485, %v843
    %v1572 = vmul.f32 %v1489, %v843
    %v1573 = vmul.f32 %v1493, %v843
    %v1574 = vmul.f32 %v1497, %v843
    %v1575 = vmul.f32 %v1501, %v843
    %v1576 = vmul.f32 %v1505, %v843
    %v1577 = vmul.f32 %v1509, %v843
    %v1578 = vmul.f32 %v1513, %v843
    %v1579 = vmul.f32 %v1517, %v843
    %v1580 = vmul.f32 %v1521, %v843
    %v1581 = vmul.f32 %v1525, %v843
    %v1582 = vmul.f32 %v1529, %v843
    %v1583 = vmul.f32 %v1533, %v843
    %v1584 = vmul.f32 %v1537, %v843
    %v1585 = vmul.f32 %v1541, %v843
    %v1586 = vmul.f32 %v1545, %v843
    %v1587 = vmul.f32 %v1549, %v843
    %v1588 = vmul.f32 %v1553, %v843
    %v1589 = vmul.f32 %v1557, %v843
    %v1590 = vmul.f32 %v1561, %v843
    %v1591 = vmul.f32 %v1565, %v843
    %v1592 = vadd.f32 %v1442, %v1567
    %v1593 = vadd.f32 %v1443, %v1568
    %v1594 = vadd.f32 %v1444, %v1569
    %v1595 = vadd.f32 %v1445, %v1570
    %v1596 = vadd.f32 %v1446, %v1571
    %v1597 = vadd.f32 %v1447, %v1572
    %v1598 = vadd.f32 %v1448, %v1573
    %v1599 = vadd.f32 %v1449, %v1574
    %v1600 = vadd.f32 %v1450, %v1575
    %v1601 = vadd.f32 %v1451, %v1576
    %v1602 = vadd.f32 %v1452, %v1577
    %v1603 = vadd.f32 %v1453, %v1578
    %v1604 = vadd.f32 %v1454, %v1579
    %v1605 = vadd.f32 %v1455, %v1580
    %v1606 = vadd.f32 %v1456, %v1581
    %v1607 = vadd.f32 %v1457, %v1582
    %v1608 = vadd.f32 %v1458, %v1583
    %v1609 = vadd.f32 %v1459, %v1584
    %v1610 = vadd.f32 %v1460, %v1585
    %v1611 = vadd.f32 %v1461, %v1586
    %v1612 = vadd.f32 %v1462, %v1587
    %v1613 = vadd.f32 %v1463, %v1588
    %v1614 = vadd.f32 %v1464, %v1589
    %v1615 = vadd.f32 %v1465, %v1590
    %v1616 = vadd.f32 %v1466, %v1591
    %1617 = vset.pattern.permute.xlu0 2
    %1618 = vperm.xlu0 %1617, %v1292
    %v1619 = vpop.permute.xlu0 %1618
    %1621 = vset.pattern.permute.xlu0 2
    %1622 = vperm.xlu0 %1621, %v1293
    %v1623 = vpop.permute.xlu0 %1622
    %1625 = vset.pattern.permute.xlu0 2
    %1626 = vperm.xlu0 %1625, %v1294
    %v1627 = vpop.permute.xlu0 %1626
    %1629 = vset.pattern.permute.xlu0 2
    %1630 = vperm.xlu0 %1629, %v1295
    %v1631 = vpop.permute.xlu0 %1630
    %1633 = vset.pattern.permute.xlu0 2
    %1634 = vperm.xlu0 %1633, %v1296
    %v1635 = vpop.permute.xlu0 %1634
    %1637 = vset.pattern.permute.xlu0 2
    %1638 = vperm.xlu0 %1637, %v1297
    %v1639 = vpop.permute.xlu0 %1638
    %1641 = vset.pattern.permute.xlu0 2
    %1642 = vperm.xlu0 %1641, %v1298
    %v1643 = vpop.permute.xlu0 %1642
    %1645 = vset.pattern.permute.xlu0 2
    %1646 = vperm.xlu0 %1645, %v1299
    %v1647 = vpop.permute.xlu0 %1646
    %1649 = vset.pattern.permute.xlu0 2
    %1650 = vperm.xlu0 %1649, %v1300
    %v1651 = vpop.permute.xlu0 %1650
    %1653 = vset.pattern.permute.xlu0 2
    %1654 = vperm.xlu0 %1653, %v1301
    %v1655 = vpop.permute.xlu0 %1654
    %1657 = vset.pattern.permute.xlu0 2
    %1658 = vperm.xlu0 %1657, %v1302
    %v1659 = vpop.permute.xlu0 %1658
    %1661 = vset.pattern.permute.xlu0 2
    %1662 = vperm.xlu0 %1661, %v1303
    %v1663 = vpop.permute.xlu0 %1662
    %1665 = vset.pattern.permute.xlu0 2
    %1666 = vperm.xlu0 %1665, %v1304
    %v1667 = vpop.permute.xlu0 %1666
    %1669 = vset.pattern.permute.xlu0 2
    %1670 = vperm.xlu0 %1669, %v1305
    %v1671 = vpop.permute.xlu0 %1670
    %1673 = vset.pattern.permute.xlu0 2
    %1674 = vperm.xlu0 %1673, %v1306
    %v1675 = vpop.permute.xlu0 %1674
    %1677 = vset.pattern.permute.xlu0 2
    %1678 = vperm.xlu0 %1677, %v1307
    %v1679 = vpop.permute.xlu0 %1678
    %1681 = vset.pattern.permute.xlu0 2
    %1682 = vperm.xlu0 %1681, %v1308
    %v1683 = vpop.permute.xlu0 %1682
    %1685 = vset.pattern.permute.xlu0 2
    %1686 = vperm.xlu0 %1685, %v1309
    %v1687 = vpop.permute.xlu0 %1686
    %1689 = vset.pattern.permute.xlu0 2
    %1690 = vperm.xlu0 %1689, %v1310
    %v1691 = vpop.permute.xlu0 %1690
    %1693 = vset.pattern.permute.xlu0 2
    %1694 = vperm.xlu0 %1693, %v1311
    %v1695 = vpop.permute.xlu0 %1694
    %1697 = vset.pattern.permute.xlu0 2
    %1698 = vperm.xlu0 %1697, %v1312
    %v1699 = vpop.permute.xlu0 %1698
    %1701 = vset.pattern.permute.xlu0 2
    %1702 = vperm.xlu0 %1701, %v1313
    %v1703 = vpop.permute.xlu0 %1702
    %1705 = vset.pattern.permute.xlu0 2
    %1706 = vperm.xlu0 %1705, %v1314
    %v1707 = vpop.permute.xlu0 %1706
    %1709 = vset.pattern.permute.xlu0 2
    %1710 = vperm.xlu0 %1709, %v1315
    %v1711 = vpop.permute.xlu0 %1710
    %1713 = vset.pattern.permute.xlu0 2
    %1714 = vperm.xlu0 %1713, %v1316
    %v1715 = vpop.permute.xlu0 %1714
    %v1717 = vmul.f32 %v1619, %v997
    %v1718 = vmul.f32 %v1623, %v997
    %v1719 = vmul.f32 %v1627, %v997
    %v1720 = vmul.f32 %v1631, %v997
    %v1721 = vmul.f32 %v1635, %v997
    %v1722 = vmul.f32 %v1639, %v997
    %v1723 = vmul.f32 %v1643, %v997
    %v1724 = vmul.f32 %v1647, %v997
    %v1725 = vmul.f32 %v1651, %v997
    %v1726 = vmul.f32 %v1655, %v997
    %v1727 = vmul.f32 %v1659, %v997
    %v1728 = vmul.f32 %v1663, %v997
    %v1729 = vmul.f32 %v1667, %v997
    %v1730 = vmul.f32 %v1671, %v997
    %v1731 = vmul.f32 %v1675, %v997
    %v1732 = vmul.f32 %v1679, %v997
    %v1733 = vmul.f32 %v1683, %v997
    %v1734 = vmul.f32 %v1687, %v997
    %v1735 = vmul.f32 %v1691, %v997
    %v1736 = vmul.f32 %v1695, %v997
    %v1737 = vmul.f32 %v1699, %v997
    %v1738 = vmul.f32 %v1703, %v997
    %v1739 = vmul.f32 %v1707, %v997
    %v1740 = vmul.f32 %v1711, %v997
    %v1741 = vmul.f32 %v1715, %v997
    %v1742 = vadd.f32 %v1592, %v1717
    %v1743 = vadd.f32 %v1593, %v1718
    %v1744 = vadd.f32 %v1594, %v1719
    %v1745 = vadd.f32 %v1595, %v1720
    %v1746 = vadd.f32 %v1596, %v1721
    %v1747 = vadd.f32 %v1597, %v1722
    %v1748 = vadd.f32 %v1598, %v1723
    %v1749 = vadd.f32 %v1599, %v1724
    %v1750 = vadd.f32 %v1600, %v1725
    %v1751 = vadd.f32 %v1601, %v1726
    %v1752 = vadd.f32 %v1602, %v1727
    %v1753 = vadd.f32 %v1603, %v1728
    %v1754 = vadd.f32 %v1604, %v1729
    %v1755 = vadd.f32 %v1605, %v1730
    %v1756 = vadd.f32 %v1606, %v1731
    %v1757 = vadd.f32 %v1607, %v1732
    %v1758 = vadd.f32 %v1608, %v1733
    %v1759 = vadd.f32 %v1609, %v1734
    %v1760 = vadd.f32 %v1610, %v1735
    %v1761 = vadd.f32 %v1611, %v1736
    %v1762 = vadd.f32 %v1612, %v1737
    %v1763 = vadd.f32 %v1613, %v1738
    %v1764 = vadd.f32 %v1614, %v1739
    %v1765 = vadd.f32 %v1615, %v1740
    %v1766 = vadd.f32 %v1616, %v1741
    %1767 = vset.pattern.permute.xlu0 3
    %1768 = vperm.xlu0 %1767, %v1292
    %v1769 = vpop.permute.xlu0 %1768
    %1771 = vset.pattern.permute.xlu0 3
    %1772 = vperm.xlu0 %1771, %v1293
    %v1773 = vpop.permute.xlu0 %1772
    %1775 = vset.pattern.permute.xlu0 3
    %1776 = vperm.xlu0 %1775, %v1294
    %v1777 = vpop.permute.xlu0 %1776
    %1779 = vset.pattern.permute.xlu0 3
    %1780 = vperm.xlu0 %1779, %v1295
    %v1781 = vpop.permute.xlu0 %1780
    %1783 = vset.pattern.permute.xlu0 3
    %1784 = vperm.xlu0 %1783, %v1296
    %v1785 = vpop.permute.xlu0 %1784
    %1787 = vset.pattern.permute.xlu0 3
    %1788 = vperm.xlu0 %1787, %v1297
    %v1789 = vpop.permute.xlu0 %1788
    %1791 = vset.pattern.permute.xlu0 3
    %1792 = vperm.xlu0 %1791, %v1298
    %v1793 = vpop.permute.xlu0 %1792
    %1795 = vset.pattern.permute.xlu0 3
    %1796 = vperm.xlu0 %1795, %v1299
    %v1797 = vpop.permute.xlu0 %1796
    %1799 = vset.pattern.permute.xlu0 3
    %1800 = vperm.xlu0 %1799, %v1300
    %v1801 = vpop.permute.xlu0 %1800
    %1803 = vset.pattern.permute.xlu0 3
    %1804 = vperm.xlu0 %1803, %v1301
    %v1805 = vpop.permute.xlu0 %1804
    %1807 = vset.pattern.permute.xlu0 3
    %1808 = vperm.xlu0 %1807, %v1302
    %v1809 = vpop.permute.xlu0 %1808
    %1811 = vset.pattern.permute.xlu0 3
    %1812 = vperm.xlu0 %1811, %v1303
    %v1813 = vpop.permute.xlu0 %1812
    %1815 = vset.pattern.permute.xlu0 3
    %1816 = vperm.xlu0 %1815, %v1304
    %v1817 = vpop.permute.xlu0 %1816
    %1819 = vset.pattern.permute.xlu0 3
    %1820 = vperm.xlu0 %1819, %v1305
    %v1821 = vpop.permute.xlu0 %1820
    %1823 = vset.pattern.permute.xlu0 3
    %1824 = vperm.xlu0 %1823, %v1306
    %v1825 = vpop.permute.xlu0 %1824
    %1827 = vset.pattern.permute.xlu0 3
    %1828 = vperm.xlu0 %1827, %v1307
    %v1829 = vpop.permute.xlu0 %1828
    %1831 = vset.pattern.permute.xlu0 3
    %1832 = vperm.xlu0 %1831, %v1308
    %v1833 = vpop.permute.xlu0 %1832
    %1835 = vset.pattern.permute.xlu0 3
    %1836 = vperm.xlu0 %1835, %v1309
    %v1837 = vpop.permute.xlu0 %1836
    %1839 = vset.pattern.permute.xlu0 3
    %1840 = vperm.xlu0 %1839, %v1310
    %v1841 = vpop.permute.xlu0 %1840
    %1843 = vset.pattern.permute.xlu0 3
    %1844 = vperm.xlu0 %1843, %v1311
    %v1845 = vpop.permute.xlu0 %1844
    %1847 = vset.pattern.permute.xlu0 3
    %1848 = vperm.xlu0 %1847, %v1312
    %v1849 = vpop.permute.xlu0 %1848
    %1851 = vset.pattern.permute.xlu0 3
    %1852 = vperm.xlu0 %1851, %v1313
    %v1853 = vpop.permute.xlu0 %1852
    %1855 = vset.pattern.permute.xlu0 3
    %1856 = vperm.xlu0 %1855, %v1314
    %v1857 = vpop.permute.xlu0 %1856
    %1859 = vset.pattern.permute.xlu0 3
    %1860 = vperm.xlu0 %1859, %v1315
    %v1861 = vpop.permute.xlu0 %1860
    %1863 = vset.pattern.permute.xlu0 3
    %1864 = vperm.xlu0 %1863, %v1316
    %v1865 = vpop.permute.xlu0 %1864
    %v1867 = vmul.f32 %v1769, %v1151
    %v1868 = vmul.f32 %v1773, %v1151
    %v1869 = vmul.f32 %v1777, %v1151
    %v1870 = vmul.f32 %v1781, %v1151
    %v1871 = vmul.f32 %v1785, %v1151
    %v1872 = vmul.f32 %v1789, %v1151
    %v1873 = vmul.f32 %v1793, %v1151
    %v1874 = vmul.f32 %v1797, %v1151
    %v1875 = vmul.f32 %v1801, %v1151
    %v1876 = vmul.f32 %v1805, %v1151
    %v1877 = vmul.f32 %v1809, %v1151
    %v1878 = vmul.f32 %v1813, %v1151
    %v1879 = vmul.f32 %v1817, %v1151
    %v1880 = vmul.f32 %v1821, %v1151
    %v1881 = vmul.f32 %v1825, %v1151
    %v1882 = vmul.f32 %v1829, %v1151
    %v1883 = vmul.f32 %v1833, %v1151
    %v1884 = vmul.f32 %v1837, %v1151
    %v1885 = vmul.f32 %v1841, %v1151
    %v1886 = vmul.f32 %v1845, %v1151
    %v1887 = vmul.f32 %v1849, %v1151
    %v1888 = vmul.f32 %v1853, %v1151
    %v1889 = vmul.f32 %v1857, %v1151
    %v1890 = vmul.f32 %v1861, %v1151
    %v1891 = vmul.f32 %v1865, %v1151
    %v1892 = vadd.f32 %v1742, %v1867
    %v1893 = vadd.f32 %v1743, %v1868
    %v1894 = vadd.f32 %v1744, %v1869
    %v1895 = vadd.f32 %v1745, %v1870
    %v1896 = vadd.f32 %v1746, %v1871
    %v1897 = vadd.f32 %v1747, %v1872
    %v1898 = vadd.f32 %v1748, %v1873
    %v1899 = vadd.f32 %v1749, %v1874
    %v1900 = vadd.f32 %v1750, %v1875
    %v1901 = vadd.f32 %v1751, %v1876
    %v1902 = vadd.f32 %v1752, %v1877
    %v1903 = vadd.f32 %v1753, %v1878
    %v1904 = vadd.f32 %v1754, %v1879
    %v1905 = vadd.f32 %v1755, %v1880
    %v1906 = vadd.f32 %v1756, %v1881
    %v1907 = vadd.f32 %v1757, %v1882
    %v1908 = vadd.f32 %v1758, %v1883
    %v1909 = vadd.f32 %v1759, %v1884
    %v1910 = vadd.f32 %v1760, %v1885
    %v1911 = vadd.f32 %v1761, %v1886
    %v1912 = vadd.f32 %v1762, %v1887
    %v1913 = vadd.f32 %v1763, %v1888
    %v1914 = vadd.f32 %v1764, %v1889
    %v1915 = vadd.f32 %v1765, %v1890
    %v1916 = vadd.f32 %v1766, %v1891
    %v1917 = vadd.f32 %v1892, %v1206
    %v1918 = vadd.f32 %v1893, %v1206
    %v1919 = vadd.f32 %v1894, %v1206
    %v1920 = vadd.f32 %v1895, %v1206
    %v1921 = vadd.f32 %v1896, %v1206
    %v1922 = vadd.f32 %v1897, %v1206
    %v1923 = vadd.f32 %v1898, %v1206
    %v1924 = vadd.f32 %v1899, %v1206
    %v1925 = vadd.f32 %v1900, %v1206
    %v1926 = vadd.f32 %v1901, %v1206
    %v1927 = vadd.f32 %v1902, %v1206
    %v1928 = vadd.f32 %v1903, %v1206
    %v1929 = vadd.f32 %v1904, %v1206
    %v1930 = vadd.f32 %v1905, %v1206
    %v1931 = vadd.f32 %v1906, %v1206
    %v1932 = vadd.f32 %v1907, %v1206
    %v1933 = vadd.f32 %v1908, %v1206
    %v1934 = vadd.f32 %v1909, %v1206
    %v1935 = vadd.f32 %v1910, %v1206
    %v1936 = vadd.f32 %v1911, %v1206
    %v1937 = vadd.f32 %v1912, %v1206
    %v1938 = vadd.f32 %v1913, %v1206
    %v1939 = vadd.f32 %v1914, %v1206
    %v1940 = vadd.f32 %v1915, %v1206
    %v1941 = vadd.f32 %v1916, %v1206
    %v1942 = vmax.f32 %v1917, 0.0
    %v1943 = vmax.f32 %v1918, 0.0
    %v1944 = vmax.f32 %v1919, 0.0
    %v1945 = vmax.f32 %v1920, 0.0
    %v1946 = vmax.f32 %v1921, 0.0
    %v1947 = vmax.f32 %v1922, 0.0
    %v1948 = vmax.f32 %v1923, 0.0
    %v1949 = vmax.f32 %v1924, 0.0
    %v1950 = vmax.f32 %v1925, 0.0
    %v1951 = vmax.f32 %v1926, 0.0
    %v1952 = vmax.f32 %v1927, 0.0
    %v1953 = vmax.f32 %v1928, 0.0
    %v1954 = vmax.f32 %v1929, 0.0
    %v1955 = vmax.f32 %v1930, 0.0
    %v1956 = vmax.f32 %v1931, 0.0
    %v1957 = vmax.f32 %v1932, 0.0
    %v1958 = vmax.f32 %v1933, 0.0
    %v1959 = vmax.f32 %v1934, 0.0
    %v1960 = vmax.f32 %v1935, 0.0
    %v1961 = vmax.f32 %v1936, 0.0
    %v1962 = vmax.f32 %v1937, 0.0
    %v1963 = vmax.f32 %v1938, 0.0
    %v1964 = vmax.f32 %v1939, 0.0
    %v1965 = vmax.f32 %v1940, 0.0
    %v1966 = vmax.f32 %v1941, 0.0
    %v1967 = vmax.f32 %v1942, %v1946
    %v1968 = vmax.f32 %v1943, %v1947
    %v1969 = vmax.f32 %v1944, %v1948
    %v1970 = vmax.f32 %v1945, %v1949
    %v1971 = vmax.f32 %v1967, %v1950
    %v1972 = vmax.f32 %v1968, %v1951
    %v1973 = vmax.f32 %v1969, %v1952
    %v1974 = vmax.f32 %v1970, %v1953
    %v1975 = vmax.f32 %v1971, %v1954
    %v1976 = vmax.f32 %v1972, %v1955
    %v1977 = vmax.f32 %v1973, %v1956
    %v1978 = vmax.f32 %v1974, %v1957
    %v1979 = vmax.f32 %v1975, %v1958
    %v1980 = vmax.f32 %v1976, %v1959
    %v1981 = vmax.f32 %v1977, %v1960
    %v1982 = vmax.f32 %v1978, %v1961
    %v1983 = vmax.f32 %v1979, %v1962
    %v1984 = vmax.f32 %v1980, %v1963
    %v1985 = vmax.f32 %v1981, %v1964
    %v1986 = vmax.f32 %v1982, %v1965
    %v1987 = vsel %vm1278, %v1966, -inf
    %v1988 = vmax.f32 %v1983, %v1987
    %v1989 = vmax.f32 %v1988, %v1984
    %v1990 = vmax.f32 %v1985, %v1986
    %v1991 = vmax.f32 %v1989, %v1990
    %v1992 = vrot.slane %v1991, 4
    %v1993 = vmax.f32 %v1991, %v1992
    %v1994 = vrot.slane %v1993, 2
    %v1995 = vmax.f32 %v1993, %v1994
    %v1996 = vrot.slane %v1995, 1
    %v1997 = vmax.f32 %v1995, %v1996
    %1998 = vst [vmem:[#allocation2 + $0x1] sm:$0x1] %v1997
    %v1999 = vld [vmem:[#allocation2] sm:$0x3]
    %2000 = vmatprep.subr.mxu0 0.0
    %2001 = vmatpush1.xpose.msra.mxu0 %v556
    %2002 = vmatprep.subr.mxu0 0.0
    %2003 = vmatpush1.xpose.msra.mxu0 0.0
    %2004 = vmatprep.subr.mxu0 0.0
    %2005 = vmatpush1.xpose.msra.mxu0 0.0
    %2006 = vmatprep.subr.mxu0 0.0
    %2007 = vmatpush1.xpose.msra.mxu0 0.0
    %2008 = vmatprep.subr.mxu0 0.0
    %2009 = vmatpush1.xpose.msra.mxu0 0.0
    %2010 = vmatprep.subr.mxu0 0.0
    %2011 = vmatpush1.xpose.msra.mxu0 0.0
    %2012 = vmatprep.subr.mxu0 0.0
    %2013 = vmatpush1.xpose.msra.mxu0 0.0
    %2014 = vmatprep.subr.mxu0 0.0
    %2015 = vmatpush1.xpose.msra.mxu0 0.0
    %2016 = vmatprep.subr.mxu0 0.0
    %2017 = vmatpush1.xpose.msra.mxu0 0.0
    %2018 = vmatprep.subr.mxu0 0.0
    %2019 = vmatpush1.xpose.msra.mxu0 0.0
    %2020 = vmatprep.subr.mxu0 0.0
    %2021 = vmatpush1.xpose.msra.mxu0 0.0
    %2022 = vmatprep.subr.mxu0 0.0
    %2023 = vmatpush1.xpose.msra.mxu0 0.0
    %2024 = vmatprep.subr.mxu0 0.0
    %2025 = vmatpush1.xpose.msra.mxu0 0.0
    %2026 = vmatprep.subr.mxu0 0.0
    %2027 = vmatpush1.xpose.msra.mxu0 0.0
    %2028 = vmatprep.subr.mxu0 0.0
    %2029 = vmatpush1.xpose.msra.mxu0 0.0
    %2030 = vmatprep.subr.mxu0 0.0
    %2031 = vmatpush1.xpose.msra.mxu0 0.0
    %2032 = vmatprep.subr.mxu0 0.0
    %2033 = vmatpush1.xpose.msra.mxu0 0.0
    %2034 = vmatprep.subr.mxu0 0.0
    %2035 = vmatpush1.xpose.msra.mxu0 0.0
    %2036 = vmatprep.subr.mxu0 0.0
    %2037 = vmatpush1.xpose.msra.mxu0 0.0
    %2038 = vmatprep.subr.mxu0 0.0
    %2039 = vmatpush1.xpose.msra.mxu0 0.0
    %2040 = vmatprep.subr.mxu0 0.0
    %2041 = vmatpush1.xpose.msra.mxu0 0.0
    %2042 = vmatprep.subr.mxu0 0.0
    %2043 = vmatpush1.xpose.msra.mxu0 0.0
    %2044 = vmatprep.subr.mxu0 0.0
    %2045 = vmatpush1.xpose.msra.mxu0 0.0
    %2046 = vmatprep.subr.mxu0 0.0
    %2047 = vmatpush1.xpose.msra.mxu0 0.0
    %2048 = vmatprep.subr.mxu0 0.0
    %2049 = vmatpush1.xpose.msra.mxu0 0.0
    %2050 = vmatprep.subr.mxu0 0.0
    %2051 = vmatpush1.xpose.msra.mxu0 0.0
    %2052 = vmatprep.subr.mxu0 0.0
    %2053 = vmatpush1.xpose.msra.mxu0 0.0
    %2054 = vmatprep.subr.mxu0 0.0
    %2055 = vmatpush1.xpose.msra.mxu0 0.0
    %2056 = vmatprep.subr.mxu0 0.0
    %2057 = vmatpush1.xpose.msra.mxu0 0.0
    %2058 = vmatprep.subr.mxu0 0.0
    %2059 = vmatpush1.xpose.msra.mxu0 0.0
    %2060 = vmatprep.subr.mxu0 0.0
    %2061 = vmatpush1.xpose.msra.mxu0 0.0
    %2062 = vmatprep.subr.mxu0 0.0
    %2063 = vmatpush1.xpose.msra.mxu0 0.0
    %2064 = vmatprep.mubr.f32.mxu0 0.0
    %2065 = vmatmul.mubr.f32.gmra.mrb[0].mxu0 %v1999
    %v2066 = vpop.f32.mrb[0].mxu0
    %v2067 = vadd.f32 0.0, %v2066
    %v2068 = vpop.f32.mrb[0].mxu0
    %2069 = vdwg.mxu0
    %2070 = vst [vmem:[#allocation3] sm:$0x3] %v2067
    // Predicated region
    $region34: #{tpu_custom_call.1} parent=1 // pred_check
      _
    $region35: #{tpu_custom_call.1} parent=1 // pred_check_branch
      %2072 = sbr.rel (0) target = $region37
    $region36: #{tpu_custom_call.1} parent=1 // pred_region
      %s2074 = ssub.s32 32, 32
      %2075 = vsyncadd [#allocation4], %s2074
      %s2077 = sshll.u32 [#allocation3], 4
      %s2078 = int_to_ptr.vmem [resolvable:$true] %s2077
      %2080 = dma.vmem_to_hbm [thread:$0]  %s2078, 32, %s8, [#allocation4]
    $region37: #{tpu_custom_call.1} parent=1 // pred_fallthru
      _
    // Predicated region
    $region38: #{tpu_custom_call.1} parent=1 // pred_check
      _
    $region39: #{tpu_custom_call.1} parent=1 // pred_check_branch
      %2082 = sbr.rel (0) target = $region41
    $region40: #{tpu_custom_call.1} parent=1 // pred_region
      %2083 = dma.done [#allocation4], 32
    $region41: #{tpu_custom_call.1} parent=1 // pred_fallthru
      _
    %2084 = vsyncpa [#allocation4], 1

</llo_original>
